<compile_context>
chip_gen: v6e
topology: v6e:2x2x1
jax: 0.10.0
libtpu: 0.0.40
codegen_flags: <defaults>
</compile_context>

<pallas_src>
import functools

import jax
import jax.numpy as jnp
from jax.experimental import pallas as pl
from jax.experimental.pallas import tpu as pltpu


def axon_kernel(x_ref, w_ref, b_ref, o_ref):
    # x_ref: (B, K) f32, w_ref: (K, tn) bf16, b_ref: (1, tn) f32, o_ref: (B, tn) f32
    x_bf = x_ref[...].astype(jnp.bfloat16)          # tiny VPU cast, hidden under weight DMA
    y = jnp.dot(x_bf, w_ref[...], preferred_element_type=jnp.float32)
    y = y + b_ref[...]                               # bias broadcast over batch rows (f32)
    o_ref[...] = jnp.maximum(y, 0.0).astype(o_ref.dtype)


def prepare_axon_params(weight, bias, *, pad_to=512):
    """One-time parameter prep (NOT in the per-call hot path).

    weight: (out_features, in_features) f32  (PyTorch nn.Linear layout)
    bias:   (out_features,)             f32
    Returns (weight_t_pad bf16 (K, N_pad), bias_pad f32 (1, N_pad)).
    N_pad is a multiple of `pad_to` (512) so it divides cleanly into either
    the single-tile (tn=N_pad) or the two-tile (tn=512) schedule.
    """
    out_features, in_features = weight.shape
    n_pad = ((out_features + pad_to - 1) // pad_to) * pad_to
    weight_t = weight.T.astype(jnp.bfloat16)                       # (K, N)
    weight_t_pad = jnp.pad(weight_t, ((0, 0), (0, n_pad - out_features)))
    bias_pad = jnp.pad(bias.astype(jnp.float32),
                       (0, n_pad - out_features)).reshape(1, n_pad)
    return weight_t_pad, bias_pad


def pick_tile_n(n_pad):
    """Device-aware N tile: 512 on dual-TC v7x (2 parallel tiles), else one big tile."""
    try:
        kind = jax.devices()[0].device_kind.lower()
    except Exception:  # no device info -> safe single-tile default
        kind = ""
    dual_tc = ("v7" in kind) or ("7x" in kind)
    if dual_tc and n_pad % 512 == 0 and (n_pad // 512) >= 2:
        return 512
    return n_pad


@functools.partial(jax.jit,
                   static_argnames=("out_features", "tn", "return_padded"))
def axon_forward(x, weight_t_pad, bias_pad, *, out_features, tn,
                 return_padded=False):
    """x: (B, imgsize, imgsize, m) f32.  Returns (B, out_features) f32
    (or the padded (B, N_pad) slab when return_padded=True)."""
    B = x.shape[0]
    K, N_pad = weight_t_pad.shape
    assert N_pad % tn == 0

    # Glue: flatten exactly like x.view(batch, m*img*img) (row-major).
    # Activation stays f32 here (8 KiB); the bf16 cast happens in-kernel.
    x2d = x.reshape(B, K)

    bytes_accessed = 4 * B * K + 2 * K * N_pad + 4 * (B * N_pad + N_pad)

    out = pl.pallas_call(
        axon_kernel,
        out_shape=jax.ShapeDtypeStruct((B, N_pad), jnp.float32),
        grid_spec=pltpu.PrefetchScalarGridSpec(
            num_scalar_prefetch=0,
            grid=(N_pad // tn,),
            in_specs=[
                pl.BlockSpec((B, K), lambda j: (0, 0)),     # small, stays resident
                pl.BlockSpec((K, tn), lambda j: (0, j)),    # weight streams over N
                pl.BlockSpec((1, tn), lambda j: (0, j)),    # bias tile
            ],
            out_specs=pl.BlockSpec((B, tn), lambda j: (0, j)),
        ),
        compiler_params=pltpu.CompilerParams(
            # "parallel" shards the (at most 2) N tiles across v7x TensorCores;
            # harmless no-op on single-TC chips where the grid is (1,).
            dimension_semantics=("parallel",),
        ),
        cost_estimate=pl.CostEstimate(
            flops=2 * B * K * N_pad,
            bytes_accessed=bytes_accessed,
            transcendentals=0,
        ),
    )(x2d, weight_t_pad, bias_pad)

    if return_padded:
        # Lane-dense (B, N_pad) slab for downstream Pallas consumers.
        return out
    # Drop the N padding (1024 -> 1000) to match nn.Linear(., 1000) semantics.
    return out[:, :out_features]


if __name__ == "__main__":
    # Small shapes consistent with Axon(m, imgsize).
    batch = 2
    m = 4
    imgsize = 16
    in_features = m * imgsize * imgsize     # 1024
    out_features = 1000

    key = jax.random.PRNGKey(0)
    kx, kw, kb = jax.random.split(key, 3)

    # Deterministic parameter init, matching nn.Linear's U(-1/sqrt(in), 1/sqrt(in)).
    bound = 1.0 / jnp.sqrt(jnp.float32(in_features))
    weight = jax.random.uniform(kw, (out_features, in_features),
                                jnp.float32, -bound, bound)   # PyTorch (out, in)
    bias = jax.random.uniform(kb, (out_features,), jnp.float32, -bound, bound)

    # One-time prep: transpose + pad + bf16 cast (hoisted out of per-call path).
    weight_t_pad, bias_pad = prepare_axon_params(weight, bias)
    n_pad = weight_t_pad.shape[1]

    # Device-aware tile choice: 1024 (one step) on v5e/v6e, 512 (two parallel
    # tiles, one per TensorCore) on v7x.
    tn = pick_tile_n(n_pad)

    # Input chosen so x.size(1) == imgsize, as the PyTorch forward assumes.
    x = jax.random.normal(kx, (batch, imgsize, imgsize, m), jnp.float32)

    out = axon_forward(x, weight_t_pad, bias_pad,
                       out_features=out_features, tn=tn)
    out = jax.block_until_ready(out)

    # Reference check (same bf16 streaming precision, f32 accumulate).
    x2d_bf = x.reshape(batch, -1).astype(jnp.bfloat16)
    w_bf = weight.T.astype(jnp.bfloat16)
    ref = jnp.maximum(
        jnp.dot(x2d_bf, w_bf, preferred_element_type=jnp.float32)
        + bias[None, :], 0.0)
    assert out.shape == (batch, out_features)
    assert jnp.allclose(out, ref, atol=2e-3, rtol=2e-3)

    print("KERNEL_OK")
</pallas_src>

<mosaic_0001>
module attributes {stable_mosaic.version = 11 : i64} {
  func.func @axon_kernel(%arg0: i32, %arg1: memref<2x1024xf32, #tpu.memory_space<vmem>>, %arg2: memref<1024x1024xbf16, #tpu.memory_space<vmem>>, %arg3: memref<1x1024xf32, #tpu.memory_space<vmem>>, %arg4: memref<2x1024xf32, #tpu.memory_space<vmem>>) attributes {dimension_semantics = [#tpu.dimension_semantics<parallel>], iteration_bounds = array<i64: 1>, scalar_prefetch = 0 : i64, scratch_operands = 0 : i64, tpu.core_type = #tpu.core_type<tc>, window_params = [{pipeline_mode = #tpu.pipeline_mode<synchronous>, transform_indices = @transform_0, window_bounds = array<i64: 2, 1024>}, {transform_indices = @transform_1, window_bounds = array<i64: 1024, 1024>}, {transform_indices = @transform_2, window_bounds = array<i64: 1, 1024>}, {transform_indices = @transform_3, window_bounds = array<i64: 2, 1024>}]} {
    %c0 = arith.constant 0 : index
    %c0_0 = arith.constant 0 : index
    %0 = vector.load %arg1[%c0, %c0_0] : memref<2x1024xf32, #tpu.memory_space<vmem>>, vector<2x1024xf32>
    %1 = arith.truncf %0 : vector<2x1024xf32> to vector<2x1024xbf16>
    %c0_1 = arith.constant 0 : index
    %c0_2 = arith.constant 0 : index
    %2 = vector.load %arg2[%c0_1, %c0_2] : memref<1024x1024xbf16, #tpu.memory_space<vmem>>, vector<1024x1024xbf16>
    %cst = arith.constant dense<0.000000e+00> : vector<2x1024xf32>
    %3 = tpu.matmul %1, %2, %cst {dimension_numbers = #tpu.dot_dimension_numbers<[1], [0], [0], [1], [0, 0, 1, 1], [], []>} : vector<2x1024xbf16>, vector<1024x1024xbf16>, vector<2x1024xf32> -> vector<2x1024xf32>
    %c0_3 = arith.constant 0 : index
    %c0_4 = arith.constant 0 : index
    %4 = vector.load %arg3[%c0_3, %c0_4] : memref<1x1024xf32, #tpu.memory_space<vmem>>, vector<1x1024xf32>
    %5 = vector.broadcast %4 : vector<1x1024xf32> to vector<2x1024xf32>
    %6 = arith.addf %3, %5 : vector<2x1024xf32>
    %cst_5 = arith.constant 0.000000e+00 : f32
    %7 = vector.broadcast %cst_5 : f32 to vector<2x1024xf32>
    %8 = arith.maximumf %6, %7 : vector<2x1024xf32>
    %c0_6 = arith.constant 0 : index
    %c0_7 = arith.constant 0 : index
    %9 = vector.load %arg4[%c0_6, %c0_7] : memref<2x1024xf32, #tpu.memory_space<vmem>>, vector<2x1024xf32>
    tpu.vector_store %arg4[%c0_6, %c0_7], %8 {strides = array<i32>} : memref<2x1024xf32, #tpu.memory_space<vmem>>, vector<2x1024xf32>,
    return
  }
  func.func @transform_0(%arg0: i32) -> (i32, i32) {
    %c0_i32 = arith.constant 0 : i32
    %c0_i32_0 = arith.constant 0 : i32
    %c0_i32_1 = arith.constant 0 : i32
    return %c0_i32, %c0_i32_0 : i32, i32
  }
  func.func @transform_1(%arg0: i32) -> (i32, i32) {
    %c0_i32 = arith.constant 0 : i32
    %c0_i32_0 = arith.constant 0 : i32
    return %c0_i32, %arg0 : i32, i32
  }
  func.func @transform_2(%arg0: i32) -> (i32, i32) {
    %c0_i32 = arith.constant 0 : i32
    %c0_i32_0 = arith.constant 0 : i32
    return %c0_i32, %arg0 : i32, i32
  }
  func.func @transform_3(%arg0: i32) -> (i32, i32) {
    %c0_i32 = arith.constant 0 : i32
    %c0_i32_0 = arith.constant 0 : i32
    return %c0_i32, %arg0 : i32, i32
  }
}

</mosaic_0001>

<llo_original>
// kernel: axon_forward.1
$region0: #{axon_forward.1}
  #allocation0 [shape = 'u32[]', space=smem, size = 0x4, offset = 0x4, fixed_abs, tag = 'smem constant byte address 0x4 - core index']
  #allocation1 [shape = 'u32[144,128]{1,0:T(1,128)}', space=vmem, size = 0x12000, scoped, tag = 'internal scratch']
  %s0 = inlined_call_operand.vmem [shape: f32[2,1024], index: 0, kind: input, shape index: {}]
  %s1 = inlined_call_operand.hbm [shape: bf16[1024,1024], index: 1, kind: input, shape index: {}]
  %s2 = inlined_call_operand.hbm [shape: f32[1,1024], index: 2, kind: input, shape index: {}]
  %s3 = inlined_call_operand.hbm [shape: f32[2,1024], index: 3, kind: output, shape index: {}]
  %s4 = sld [smem:[#allocation0]]
  $region30: #{axon_forward.1} parent=0
    _
  %s6 = ssub.s32 1, %s4
  %s7 = scalar_select 0, %s6, %s4
  $region1: #{axon_forward.1} parent=0
    #allocation2 [shape = 'u8[2097152]{0}', space=vmem, size = 0x200000, scoped, tag = 'input window, operand 1, single buffered']
    #allocation3 [shape = 's32[1]{0}', space=sflag, size = 0x4, scoped, tag = 'scoped memory for axon_forward.1']
    #allocation4 [shape = 's32[1]{0}', space=sflag, size = 0x4, scoped, tag = 'scoped memory for axon_forward.1']
    #allocation5 [shape = 'u8[4096]{0}', space=vmem, size = 0x1000, scoped, tag = 'input window, operand 2, single buffered']
    #allocation6 [shape = 's32[1]{0}', space=sflag, size = 0x4, scoped, tag = 'scoped memory for axon_forward.1']
    #allocation7 [shape = 'u8[8192]{0}', space=vmem, size = 0x2000, scoped, tag = 'output window, operand 0, single buffered']
    %8 = vsyncpa [#allocation3], 0
    %9 = vsyncpa [#allocation6], 0
    %10 = vsyncpa [#allocation4], 0
    // Predicated region
    $region2: #{axon_forward.1} parent=1 // pred_check
      _
    $region3: #{axon_forward.1} parent=1 // pred_check_branch
      %12 = sbr.rel (0) target = $region5
    $region4: #{axon_forward.1} parent=1 // pred_region
      _
    $region5: #{axon_forward.1} parent=1 // pred_fallthru
      _
    // Predicated region
    $region6: #{axon_forward.1} parent=1 // pred_check
      _
    $region7: #{axon_forward.1} parent=1 // pred_check_branch
      %14 = sbr.rel (0) target = $region9
    $region8: #{axon_forward.1} parent=1 // pred_region
      %s16 = ssub.s32 65536, 65536
      %17 = vsyncadd [#allocation3], %s16
      %s18 = sshll.u32 [#allocation2], 4
      %s19 = int_to_ptr.vmem [resolvable:$true] %s18
      %24 = dma.hbm_to_vmem [thread:$0]  %s1, 65536, %s19, [#allocation3], 512, 512, 32
    $region9: #{axon_forward.1} parent=1 // pred_fallthru
      _
    // Predicated region
    $region10: #{axon_forward.1} parent=1 // pred_check
      _
    $region11: #{axon_forward.1} parent=1 // pred_check_branch
      %26 = sbr.rel (0) target = $region13
    $region12: #{axon_forward.1} parent=1 // pred_region
      %s28 = ssub.s32 128, 128
      %29 = vsyncadd [#allocation6], %s28
      %s31 = sshll.u32 [#allocation5], 4
      %s32 = int_to_ptr.vmem [resolvable:$true] %s31
      %34 = dma.hbm_to_vmem [thread:$0]  %s2, 128, %s32, [#allocation6]
    $region13: #{axon_forward.1} parent=1 // pred_fallthru
      _
    // Predicated region
    $region14: #{axon_forward.1} parent=1 // pred_check
      _
    $region15: #{axon_forward.1} parent=1 // pred_check_branch
      %36 = sbr.rel (0) target = $region17
    $region16: #{axon_forward.1} parent=1 // pred_region
      %37 = dma.done [#allocation3], 65536
    $region17: #{axon_forward.1} parent=1 // pred_fallthru
      _
    // Predicated region
    $region18: #{axon_forward.1} parent=1 // pred_check
      _
    $region19: #{axon_forward.1} parent=1 // pred_check_branch
      %39 = sbr.rel (0) target = $region21
    $region20: #{axon_forward.1} parent=1 // pred_region
      %40 = dma.done [#allocation6], 128
    $region21: #{axon_forward.1} parent=1 // pred_fallthru
      _
    %v41 = vld [vmem:[%s0] sm:$0xff]
    %v42 = vld [vmem:[%s0 + $0x8] sm:$0xff]
    %v45 = vcombine.high %v41, %v41
    %v47 = vunpack.c.l.s4 1983009808
    %v48 = vunpack.c.0.s8 %v47
    %v49 = vlaneseq
    %v50 = vshrl.u32 %v49, 7
    %v51 = vsub.s32 %v48, %v50
    %v52 = vrot.slane %v41, %v51
    %v54 = vunpack.c.l.s4 1983009808
    %v55 = vunpack.c.0.s8 %v54
    %v56 = vlaneseq
    %v57 = vshrl.u32 %v56, 7
    %v58 = vsub.s32 %v55, %v57
    %v59 = vrot.slane %v45, %v58
    %v60 = vcombine.high %v52, %v52
    %v61 = vcombine.high %v59, %v59
    %v62 = vcombine.high %v42, %v42
    %v64 = vunpack.c.l.s4 1983009808
    %v65 = vunpack.c.0.s8 %v64
    %v66 = vlaneseq
    %v67 = vshrl.u32 %v66, 7
    %v68 = vsub.s32 %v65, %v67
    %v69 = vrot.slane %v42, %v68
    %v71 = vunpack.c.l.s4 1983009808
    %v72 = vunpack.c.0.s8 %v71
    %v73 = vlaneseq
    %v74 = vshrl.u32 %v73, 7
    %v75 = vsub.s32 %v72, %v74
    %v76 = vrot.slane %v62, %v75
    %v77 = vcombine.high %v69, %v69
    %v78 = vcombine.high %v76, %v76
    %v87 = vpack.c.bf16 %v52, %v52
    %v88 = vpack.c.bf16 %v60, %v60
    %v89 = vpack.c.bf16 %v59, %v59
    %v90 = vpack.c.bf16 %v61, %v61
    %v91 = vpack.c.bf16 %v69, %v69
    %v92 = vpack.c.bf16 %v77, %v77
    %v93 = vpack.c.bf16 %v76, %v76
    %v94 = vpack.c.bf16 %v78, %v78
    %v95 = vld [vmem:[#allocation2] sm:$0xff]
    %v96 = vld [vmem:[#allocation2 + $0x8] sm:$0xff]
    %v97 = vld [vmem:[#allocation2 + $0x10] sm:$0xff]
    %v98 = vld [vmem:[#allocation2 + $0x18] sm:$0xff]
    %v99 = vld [vmem:[#allocation2 + $0x20] sm:$0xff]
    %v100 = vld [vmem:[#allocation2 + $0x28] sm:$0xff]
    %v101 = vld [vmem:[#allocation2 + $0x30] sm:$0xff]
    %v102 = vld [vmem:[#allocation2 + $0x38] sm:$0xff]
    %v103 = vld [vmem:[#allocation2 + $0x40] sm:$0xff]
    %v104 = vld [vmem:[#allocation2 + $0x48] sm:$0xff]
    %v105 = vld [vmem:[#allocation2 + $0x50] sm:$0xff]
    %v106 = vld [vmem:[#allocation2 + $0x58] sm:$0xff]
    %v107 = vld [vmem:[#allocation2 + $0x60] sm:$0xff]
    %v108 = vld [vmem:[#allocation2 + $0x68] sm:$0xff]
    %v109 = vld [vmem:[#allocation2 + $0x70] sm:$0xff]
    %v110 = vld [vmem:[#allocation2 + $0x78] sm:$0xff]
    %v111 = vld [vmem:[#allocation2 + $0x80] sm:$0xff]
    %v112 = vld [vmem:[#allocation2 + $0x88] sm:$0xff]
    %v113 = vld [vmem:[#allocation2 + $0x90] sm:$0xff]
    %v114 = vld [vmem:[#allocation2 + $0x98] sm:$0xff]
    %v115 = vld [vmem:[#allocation2 + $0xa0] sm:$0xff]
    %v116 = vld [vmem:[#allocation2 + $0xa8] sm:$0xff]
    %v117 = vld [vmem:[#allocation2 + $0xb0] sm:$0xff]
    %v118 = vld [vmem:[#allocation2 + $0xb8] sm:$0xff]
    %v119 = vld [vmem:[#allocation2 + $0xc0] sm:$0xff]
    %v120 = vld [vmem:[#allocation2 + $0xc8] sm:$0xff]
    %v121 = vld [vmem:[#allocation2 + $0xd0] sm:$0xff]
    %v122 = vld [vmem:[#allocation2 + $0xd8] sm:$0xff]
    %v123 = vld [vmem:[#allocation2 + $0xe0] sm:$0xff]
    %v124 = vld [vmem:[#allocation2 + $0xe8] sm:$0xff]
    %v125 = vld [vmem:[#allocation2 + $0xf0] sm:$0xff]
    %v126 = vld [vmem:[#allocation2 + $0xf8] sm:$0xff]
    %v127 = vld [vmem:[#allocation2 + $0x100] sm:$0xff]
    %v128 = vld [vmem:[#allocation2 + $0x108] sm:$0xff]
    %v129 = vld [vmem:[#allocation2 + $0x110] sm:$0xff]
    %v130 = vld [vmem:[#allocation2 + $0x118] sm:$0xff]
    %v131 = vld [vmem:[#allocation2 + $0x120] sm:$0xff]
    %v132 = vld [vmem:[#allocation2 + $0x128] sm:$0xff]
    %v133 = vld [vmem:[#allocation2 + $0x130] sm:$0xff]
    %v134 = vld [vmem:[#allocation2 + $0x138] sm:$0xff]
    %v135 = vld [vmem:[#allocation2 + $0x140] sm:$0xff]
    %v136 = vld [vmem:[#allocation2 + $0x148] sm:$0xff]
    %v137 = vld [vmem:[#allocation2 + $0x150] sm:$0xff]
    %v138 = vld [vmem:[#allocation2 + $0x158] sm:$0xff]
    %v139 = vld [vmem:[#allocation2 + $0x160] sm:$0xff]
    %v140 = vld [vmem:[#allocation2 + $0x168] sm:$0xff]
    %v141 = vld [vmem:[#allocation2 + $0x170] sm:$0xff]
    %v142 = vld [vmem:[#allocation2 + $0x178] sm:$0xff]
    %v143 = vld [vmem:[#allocation2 + $0x180] sm:$0xff]
    %v144 = vld [vmem:[#allocation2 + $0x188] sm:$0xff]
    %v145 = vld [vmem:[#allocation2 + $0x190] sm:$0xff]
    %v146 = vld [vmem:[#allocation2 + $0x198] sm:$0xff]
    %v147 = vld [vmem:[#allocation2 + $0x1a0] sm:$0xff]
    %v148 = vld [vmem:[#allocation2 + $0x1a8] sm:$0xff]
    %v149 = vld [vmem:[#allocation2 + $0x1b0] sm:$0xff]
    %v150 = vld [vmem:[#allocation2 + $0x1b8] sm:$0xff]
    %v151 = vld [vmem:[#allocation2 + $0x1c0] sm:$0xff]
    %v152 = vld [vmem:[#allocation2 + $0x1c8] sm:$0xff]
    %v153 = vld [vmem:[#allocation2 + $0x1d0] sm:$0xff]
    %v154 = vld [vmem:[#allocation2 + $0x1d8] sm:$0xff]
    %v155 = vld [vmem:[#allocation2 + $0x1e0] sm:$0xff]
    %v156 = vld [vmem:[#allocation2 + $0x1e8] sm:$0xff]
    %v157 = vld [vmem:[#allocation2 + $0x1f0] sm:$0xff]
    %v158 = vld [vmem:[#allocation2 + $0x1f8] sm:$0xff]
    %v159 = vld [vmem:[#allocation2 + $0x200] sm:$0xff]
    %v160 = vld [vmem:[#allocation2 + $0x208] sm:$0xff]
    %v161 = vld [vmem:[#allocation2 + $0x210] sm:$0xff]
    %v162 = vld [vmem:[#allocation2 + $0x218] sm:$0xff]
    %v163 = vld [vmem:[#allocation2 + $0x220] sm:$0xff]
    %v164 = vld [vmem:[#allocation2 + $0x228] sm:$0xff]
    %v165 = vld [vmem:[#allocation2 + $0x230] sm:$0xff]
    %v166 = vld [vmem:[#allocation2 + $0x238] sm:$0xff]
    %v167 = vld [vmem:[#allocation2 + $0x240] sm:$0xff]
    %v168 = vld [vmem:[#allocation2 + $0x248] sm:$0xff]
    %v169 = vld [vmem:[#allocation2 + $0x250] sm:$0xff]
    %v170 = vld [vmem:[#allocation2 + $0x258] sm:$0xff]
    %v171 = vld [vmem:[#allocation2 + $0x260] sm:$0xff]
    %v172 = vld [vmem:[#allocation2 + $0x268] sm:$0xff]
    %v173 = vld [vmem:[#allocation2 + $0x270] sm:$0xff]
    %v174 = vld [vmem:[#allocation2 + $0x278] sm:$0xff]
    %v175 = vld [vmem:[#allocation2 + $0x280] sm:$0xff]
    %v176 = vld [vmem:[#allocation2 + $0x288] sm:$0xff]
    %v177 = vld [vmem:[#allocation2 + $0x290] sm:$0xff]
    %v178 = vld [vmem:[#allocation2 + $0x298] sm:$0xff]
    %v179 = vld [vmem:[#allocation2 + $0x2a0] sm:$0xff]
    %v180 = vld [vmem:[#allocation2 + $0x2a8] sm:$0xff]
    %v181 = vld [vmem:[#allocation2 + $0x2b0] sm:$0xff]
    %v182 = vld [vmem:[#allocation2 + $0x2b8] sm:$0xff]
    %v183 = vld [vmem:[#allocation2 + $0x2c0] sm:$0xff]
    %v184 = vld [vmem:[#allocation2 + $0x2c8] sm:$0xff]
    %v185 = vld [vmem:[#allocation2 + $0x2d0] sm:$0xff]
    %v186 = vld [vmem:[#allocation2 + $0x2d8] sm:$0xff]
    %v187 = vld [vmem:[#allocation2 + $0x2e0] sm:$0xff]
    %v188 = vld [vmem:[#allocation2 + $0x2e8] sm:$0xff]
    %v189 = vld [vmem:[#allocation2 + $0x2f0] sm:$0xff]
    %v190 = vld [vmem:[#allocation2 + $0x2f8] sm:$0xff]
    %v191 = vld [vmem:[#allocation2 + $0x300] sm:$0xff]
    %v192 = vld [vmem:[#allocation2 + $0x308] sm:$0xff]
    %v193 = vld [vmem:[#allocation2 + $0x310] sm:$0xff]
    %v194 = vld [vmem:[#allocation2 + $0x318] sm:$0xff]
    %v195 = vld [vmem:[#allocation2 + $0x320] sm:$0xff]
    %v196 = vld [vmem:[#allocation2 + $0x328] sm:$0xff]
    %v197 = vld [vmem:[#allocation2 + $0x330] sm:$0xff]
    %v198 = vld [vmem:[#allocation2 + $0x338] sm:$0xff]
    %v199 = vld [vmem:[#allocation2 + $0x340] sm:$0xff]
    %v200 = vld [vmem:[#allocation2 + $0x348] sm:$0xff]
    %v201 = vld [vmem:[#allocation2 + $0x350] sm:$0xff]
    %v202 = vld [vmem:[#allocation2 + $0x358] sm:$0xff]
    %v203 = vld [vmem:[#allocation2 + $0x360] sm:$0xff]
    %v204 = vld [vmem:[#allocation2 + $0x368] sm:$0xff]
    %v205 = vld [vmem:[#allocation2 + $0x370] sm:$0xff]
    %v206 = vld [vmem:[#allocation2 + $0x378] sm:$0xff]
    %v207 = vld [vmem:[#allocation2 + $0x380] sm:$0xff]
    %v208 = vld [vmem:[#allocation2 + $0x388] sm:$0xff]
    %v209 = vld [vmem:[#allocation2 + $0x390] sm:$0xff]
    %v210 = vld [vmem:[#allocation2 + $0x398] sm:$0xff]
    %v211 = vld [vmem:[#allocation2 + $0x3a0] sm:$0xff]
    %v212 = vld [vmem:[#allocation2 + $0x3a8] sm:$0xff]
    %v213 = vld [vmem:[#allocation2 + $0x3b0] sm:$0xff]
    %v214 = vld [vmem:[#allocation2 + $0x3b8] sm:$0xff]
    %v215 = vld [vmem:[#allocation2 + $0x3c0] sm:$0xff]
    %v216 = vld [vmem:[#allocation2 + $0x3c8] sm:$0xff]
    %v217 = vld [vmem:[#allocation2 + $0x3d0] sm:$0xff]
    %v218 = vld [vmem:[#allocation2 + $0x3d8] sm:$0xff]
    %v219 = vld [vmem:[#allocation2 + $0x3e0] sm:$0xff]
    %v220 = vld [vmem:[#allocation2 + $0x3e8] sm:$0xff]
    %v221 = vld [vmem:[#allocation2 + $0x3f0] sm:$0xff]
    %v222 = vld [vmem:[#allocation2 + $0x3f8] sm:$0xff]
    %v223 = vld [vmem:[#allocation2 + $0x400] sm:$0xff]
    %v224 = vld [vmem:[#allocation2 + $0x408] sm:$0xff]
    %v225 = vld [vmem:[#allocation2 + $0x410] sm:$0xff]
    %v226 = vld [vmem:[#allocation2 + $0x418] sm:$0xff]
    %v227 = vld [vmem:[#allocation2 + $0x420] sm:$0xff]
    %v228 = vld [vmem:[#allocation2 + $0x428] sm:$0xff]
    %v229 = vld [vmem:[#allocation2 + $0x430] sm:$0xff]
    %v230 = vld [vmem:[#allocation2 + $0x438] sm:$0xff]
    %v231 = vld [vmem:[#allocation2 + $0x440] sm:$0xff]
    %v232 = vld [vmem:[#allocation2 + $0x448] sm:$0xff]
    %v233 = vld [vmem:[#allocation2 + $0x450] sm:$0xff]
    %v234 = vld [vmem:[#allocation2 + $0x458] sm:$0xff]
    %v235 = vld [vmem:[#allocation2 + $0x460] sm:$0xff]
    %v236 = vld [vmem:[#allocation2 + $0x468] sm:$0xff]
    %v237 = vld [vmem:[#allocation2 + $0x470] sm:$0xff]
    %v238 = vld [vmem:[#allocation2 + $0x478] sm:$0xff]
    %v239 = vld [vmem:[#allocation2 + $0x480] sm:$0xff]
    %v240 = vld [vmem:[#allocation2 + $0x488] sm:$0xff]
    %v241 = vld [vmem:[#allocation2 + $0x490] sm:$0xff]
    %v242 = vld [vmem:[#allocation2 + $0x498] sm:$0xff]
    %v243 = vld [vmem:[#allocation2 + $0x4a0] sm:$0xff]
    %v244 = vld [vmem:[#allocation2 + $0x4a8] sm:$0xff]
    %v245 = vld [vmem:[#allocation2 + $0x4b0] sm:$0xff]
    %v246 = vld [vmem:[#allocation2 + $0x4b8] sm:$0xff]
    %v247 = vld [vmem:[#allocation2 + $0x4c0] sm:$0xff]
    %v248 = vld [vmem:[#allocation2 + $0x4c8] sm:$0xff]
    %v249 = vld [vmem:[#allocation2 + $0x4d0] sm:$0xff]
    %v250 = vld [vmem:[#allocation2 + $0x4d8] sm:$0xff]
    %v251 = vld [vmem:[#allocation2 + $0x4e0] sm:$0xff]
    %v252 = vld [vmem:[#allocation2 + $0x4e8] sm:$0xff]
    %v253 = vld [vmem:[#allocation2 + $0x4f0] sm:$0xff]
    %v254 = vld [vmem:[#allocation2 + $0x4f8] sm:$0xff]
    %v255 = vld [vmem:[#allocation2 + $0x500] sm:$0xff]
    %v256 = vld [vmem:[#allocation2 + $0x508] sm:$0xff]
    %v257 = vld [vmem:[#allocation2 + $0x510] sm:$0xff]
    %v258 = vld [vmem:[#allocation2 + $0x518] sm:$0xff]
    %v259 = vld [vmem:[#allocation2 + $0x520] sm:$0xff]
    %v260 = vld [vmem:[#allocation2 + $0x528] sm:$0xff]
    %v261 = vld [vmem:[#allocation2 + $0x530] sm:$0xff]
    %v262 = vld [vmem:[#allocation2 + $0x538] sm:$0xff]
    %v263 = vld [vmem:[#allocation2 + $0x540] sm:$0xff]
    %v264 = vld [vmem:[#allocation2 + $0x548] sm:$0xff]
    %v265 = vld [vmem:[#allocation2 + $0x550] sm:$0xff]
    %v266 = vld [vmem:[#allocation2 + $0x558] sm:$0xff]
    %v267 = vld [vmem:[#allocation2 + $0x560] sm:$0xff]
    %v268 = vld [vmem:[#allocation2 + $0x568] sm:$0xff]
    %v269 = vld [vmem:[#allocation2 + $0x570] sm:$0xff]
    %v270 = vld [vmem:[#allocation2 + $0x578] sm:$0xff]
    %v271 = vld [vmem:[#allocation2 + $0x580] sm:$0xff]
    %v272 = vld [vmem:[#allocation2 + $0x588] sm:$0xff]
    %v273 = vld [vmem:[#allocation2 + $0x590] sm:$0xff]
    %v274 = vld [vmem:[#allocation2 + $0x598] sm:$0xff]
    %v275 = vld [vmem:[#allocation2 + $0x5a0] sm:$0xff]
    %v276 = vld [vmem:[#allocation2 + $0x5a8] sm:$0xff]
    %v277 = vld [vmem:[#allocation2 + $0x5b0] sm:$0xff]
    %v278 = vld [vmem:[#allocation2 + $0x5b8] sm:$0xff]
    %v279 = vld [vmem:[#allocation2 + $0x5c0] sm:$0xff]
    %v280 = vld [vmem:[#allocation2 + $0x5c8] sm:$0xff]
    %v281 = vld [vmem:[#allocation2 + $0x5d0] sm:$0xff]
    %v282 = vld [vmem:[#allocation2 + $0x5d8] sm:$0xff]
    %v283 = vld [vmem:[#allocation2 + $0x5e0] sm:$0xff]
    %v284 = vld [vmem:[#allocation2 + $0x5e8] sm:$0xff]
    %v285 = vld [vmem:[#allocation2 + $0x5f0] sm:$0xff]
    %v286 = vld [vmem:[#allocation2 + $0x5f8] sm:$0xff]
    %v287 = vld [vmem:[#allocation2 + $0x600] sm:$0xff]
    %v288 = vld [vmem:[#allocation2 + $0x608] sm:$0xff]
    %v289 = vld [vmem:[#allocation2 + $0x610] sm:$0xff]
    %v290 = vld [vmem:[#allocation2 + $0x618] sm:$0xff]
    %v291 = vld [vmem:[#allocation2 + $0x620] sm:$0xff]
    %v292 = vld [vmem:[#allocation2 + $0x628] sm:$0xff]
    %v293 = vld [vmem:[#allocation2 + $0x630] sm:$0xff]
    %v294 = vld [vmem:[#allocation2 + $0x638] sm:$0xff]
    %v295 = vld [vmem:[#allocation2 + $0x640] sm:$0xff]
    %v296 = vld [vmem:[#allocation2 + $0x648] sm:$0xff]
    %v297 = vld [vmem:[#allocation2 + $0x650] sm:$0xff]
    %v298 = vld [vmem:[#allocation2 + $0x658] sm:$0xff]
    %v299 = vld [vmem:[#allocation2 + $0x660] sm:$0xff]
    %v300 = vld [vmem:[#allocation2 + $0x668] sm:$0xff]
    %v301 = vld [vmem:[#allocation2 + $0x670] sm:$0xff]
    %v302 = vld [vmem:[#allocation2 + $0x678] sm:$0xff]
    %v303 = vld [vmem:[#allocation2 + $0x680] sm:$0xff]
    %v304 = vld [vmem:[#allocation2 + $0x688] sm:$0xff]
    %v305 = vld [vmem:[#allocation2 + $0x690] sm:$0xff]
    %v306 = vld [vmem:[#allocation2 + $0x698] sm:$0xff]
    %v307 = vld [vmem:[#allocation2 + $0x6a0] sm:$0xff]
    %v308 = vld [vmem:[#allocation2 + $0x6a8] sm:$0xff]
    %v309 = vld [vmem:[#allocation2 + $0x6b0] sm:$0xff]
    %v310 = vld [vmem:[#allocation2 + $0x6b8] sm:$0xff]
    %v311 = vld [vmem:[#allocation2 + $0x6c0] sm:$0xff]
    %v312 = vld [vmem:[#allocation2 + $0x6c8] sm:$0xff]
    %v313 = vld [vmem:[#allocation2 + $0x6d0] sm:$0xff]
    %v314 = vld [vmem:[#allocation2 + $0x6d8] sm:$0xff]
    %v315 = vld [vmem:[#allocation2 + $0x6e0] sm:$0xff]
    %v316 = vld [vmem:[#allocation2 + $0x6e8] sm:$0xff]
    %v317 = vld [vmem:[#allocation2 + $0x6f0] sm:$0xff]
    %v318 = vld [vmem:[#allocation2 + $0x6f8] sm:$0xff]
    %v319 = vld [vmem:[#allocation2 + $0x700] sm:$0xff]
    %v320 = vld [vmem:[#allocation2 + $0x708] sm:$0xff]
    %v321 = vld [vmem:[#allocation2 + $0x710] sm:$0xff]
    %v322 = vld [vmem:[#allocation2 + $0x718] sm:$0xff]
    %v323 = vld [vmem:[#allocation2 + $0x720] sm:$0xff]
    %v324 = vld [vmem:[#allocation2 + $0x728] sm:$0xff]
    %v325 = vld [vmem:[#allocation2 + $0x730] sm:$0xff]
    %v326 = vld [vmem:[#allocation2 + $0x738] sm:$0xff]
    %v327 = vld [vmem:[#allocation2 + $0x740] sm:$0xff]
    %v328 = vld [vmem:[#allocation2 + $0x748] sm:$0xff]
    %v329 = vld [vmem:[#allocation2 + $0x750] sm:$0xff]
    %v330 = vld [vmem:[#allocation2 + $0x758] sm:$0xff]
    %v331 = vld [vmem:[#allocation2 + $0x760] sm:$0xff]
    %v332 = vld [vmem:[#allocation2 + $0x768] sm:$0xff]
    %v333 = vld [vmem:[#allocation2 + $0x770] sm:$0xff]
    %v334 = vld [vmem:[#allocation2 + $0x778] sm:$0xff]
    %v335 = vld [vmem:[#allocation2 + $0x780] sm:$0xff]
    %v336 = vld [vmem:[#allocation2 + $0x788] sm:$0xff]
    %v337 = vld [vmem:[#allocation2 + $0x790] sm:$0xff]
    %v338 = vld [vmem:[#allocation2 + $0x798] sm:$0xff]
    %v339 = vld [vmem:[#allocation2 + $0x7a0] sm:$0xff]
    %v340 = vld [vmem:[#allocation2 + $0x7a8] sm:$0xff]
    %v341 = vld [vmem:[#allocation2 + $0x7b0] sm:$0xff]
    %v342 = vld [vmem:[#allocation2 + $0x7b8] sm:$0xff]
    %v343 = vld [vmem:[#allocation2 + $0x7c0] sm:$0xff]
    %v344 = vld [vmem:[#allocation2 + $0x7c8] sm:$0xff]
    %v345 = vld [vmem:[#allocation2 + $0x7d0] sm:$0xff]
    %v346 = vld [vmem:[#allocation2 + $0x7d8] sm:$0xff]
    %v347 = vld [vmem:[#allocation2 + $0x7e0] sm:$0xff]
    %v348 = vld [vmem:[#allocation2 + $0x7e8] sm:$0xff]
    %v349 = vld [vmem:[#allocation2 + $0x7f0] sm:$0xff]
    %v350 = vld [vmem:[#allocation2 + $0x7f8] sm:$0xff]
    %v351 = vld [vmem:[#allocation2 + $0x800] sm:$0xff]
    %v352 = vld [vmem:[#allocation2 + $0x808] sm:$0xff]
    %v353 = vld [vmem:[#allocation2 + $0x810] sm:$0xff]
    %v354 = vld [vmem:[#allocation2 + $0x818] sm:$0xff]
    %v355 = vld [vmem:[#allocation2 + $0x820] sm:$0xff]
    %v356 = vld [vmem:[#allocation2 + $0x828] sm:$0xff]
    %v357 = vld [vmem:[#allocation2 + $0x830] sm:$0xff]
    %v358 = vld [vmem:[#allocation2 + $0x838] sm:$0xff]
    %v359 = vld [vmem:[#allocation2 + $0x840] sm:$0xff]
    %v360 = vld [vmem:[#allocation2 + $0x848] sm:$0xff]
    %v361 = vld [vmem:[#allocation2 + $0x850] sm:$0xff]
    %v362 = vld [vmem:[#allocation2 + $0x858] sm:$0xff]
    %v363 = vld [vmem:[#allocation2 + $0x860] sm:$0xff]
    %v364 = vld [vmem:[#allocation2 + $0x868] sm:$0xff]
    %v365 = vld [vmem:[#allocation2 + $0x870] sm:$0xff]
    %v366 = vld [vmem:[#allocation2 + $0x878] sm:$0xff]
    %v367 = vld [vmem:[#allocation2 + $0x880] sm:$0xff]
    %v368 = vld [vmem:[#allocation2 + $0x888] sm:$0xff]
    %v369 = vld [vmem:[#allocation2 + $0x890] sm:$0xff]
    %v370 = vld [vmem:[#allocation2 + $0x898] sm:$0xff]
    %v371 = vld [vmem:[#allocation2 + $0x8a0] sm:$0xff]
    %v372 = vld [vmem:[#allocation2 + $0x8a8] sm:$0xff]
    %v373 = vld [vmem:[#allocation2 + $0x8b0] sm:$0xff]
    %v374 = vld [vmem:[#allocation2 + $0x8b8] sm:$0xff]
    %v375 = vld [vmem:[#allocation2 + $0x8c0] sm:$0xff]
    %v376 = vld [vmem:[#allocation2 + $0x8c8] sm:$0xff]
    %v377 = vld [vmem:[#allocation2 + $0x8d0] sm:$0xff]
    %v378 = vld [vmem:[#allocation2 + $0x8d8] sm:$0xff]
    %v379 = vld [vmem:[#allocation2 + $0x8e0] sm:$0xff]
    %v380 = vld [vmem:[#allocation2 + $0x8e8] sm:$0xff]
    %v381 = vld [vmem:[#allocation2 + $0x8f0] sm:$0xff]
    %v382 = vld [vmem:[#allocation2 + $0x8f8] sm:$0xff]
    %v383 = vld [vmem:[#allocation2 + $0x900] sm:$0xff]
    %v384 = vld [vmem:[#allocation2 + $0x908] sm:$0xff]
    %v385 = vld [vmem:[#allocation2 + $0x910] sm:$0xff]
    %v386 = vld [vmem:[#allocation2 + $0x918] sm:$0xff]
    %v387 = vld [vmem:[#allocation2 + $0x920] sm:$0xff]
    %v388 = vld [vmem:[#allocation2 + $0x928] sm:$0xff]
    %v389 = vld [vmem:[#allocation2 + $0x930] sm:$0xff]
    %v390 = vld [vmem:[#allocation2 + $0x938] sm:$0xff]
    %v391 = vld [vmem:[#allocation2 + $0x940] sm:$0xff]
    %v392 = vld [vmem:[#allocation2 + $0x948] sm:$0xff]
    %v393 = vld [vmem:[#allocation2 + $0x950] sm:$0xff]
    %v394 = vld [vmem:[#allocation2 + $0x958] sm:$0xff]
    %v395 = vld [vmem:[#allocation2 + $0x960] sm:$0xff]
    %v396 = vld [vmem:[#allocation2 + $0x968] sm:$0xff]
    %v397 = vld [vmem:[#allocation2 + $0x970] sm:$0xff]
    %v398 = vld [vmem:[#allocation2 + $0x978] sm:$0xff]
    %v399 = vld [vmem:[#allocation2 + $0x980] sm:$0xff]
    %v400 = vld [vmem:[#allocation2 + $0x988] sm:$0xff]
    %v401 = vld [vmem:[#allocation2 + $0x990] sm:$0xff]
    %v402 = vld [vmem:[#allocation2 + $0x998] sm:$0xff]
    %v403 = vld [vmem:[#allocation2 + $0x9a0] sm:$0xff]
    %v404 = vld [vmem:[#allocation2 + $0x9a8] sm:$0xff]
    %v405 = vld [vmem:[#allocation2 + $0x9b0] sm:$0xff]
    %v406 = vld [vmem:[#allocation2 + $0x9b8] sm:$0xff]
    %v407 = vld [vmem:[#allocation2 + $0x9c0] sm:$0xff]
    %v408 = vld [vmem:[#allocation2 + $0x9c8] sm:$0xff]
    %v409 = vld [vmem:[#allocation2 + $0x9d0] sm:$0xff]
    %v410 = vld [vmem:[#allocation2 + $0x9d8] sm:$0xff]
    %v411 = vld [vmem:[#allocation2 + $0x9e0] sm:$0xff]
    %v412 = vld [vmem:[#allocation2 + $0x9e8] sm:$0xff]
    %v413 = vld [vmem:[#allocation2 + $0x9f0] sm:$0xff]
    %v414 = vld [vmem:[#allocation2 + $0x9f8] sm:$0xff]
    %v415 = vld [vmem:[#allocation2 + $0xa00] sm:$0xff]
    %v416 = vld [vmem:[#allocation2 + $0xa08] sm:$0xff]
    %v417 = vld [vmem:[#allocation2 + $0xa10] sm:$0xff]
    %v418 = vld [vmem:[#allocation2 + $0xa18] sm:$0xff]
    %v419 = vld [vmem:[#allocation2 + $0xa20] sm:$0xff]
    %v420 = vld [vmem:[#allocation2 + $0xa28] sm:$0xff]
    %v421 = vld [vmem:[#allocation2 + $0xa30] sm:$0xff]
    %v422 = vld [vmem:[#allocation2 + $0xa38] sm:$0xff]
    %v423 = vld [vmem:[#allocation2 + $0xa40] sm:$0xff]
    %v424 = vld [vmem:[#allocation2 + $0xa48] sm:$0xff]
    %v425 = vld [vmem:[#allocation2 + $0xa50] sm:$0xff]
    %v426 = vld [vmem:[#allocation2 + $0xa58] sm:$0xff]
    %v427 = vld [vmem:[#allocation2 + $0xa60] sm:$0xff]
    %v428 = vld [vmem:[#allocation2 + $0xa68] sm:$0xff]
    %v429 = vld [vmem:[#allocation2 + $0xa70] sm:$0xff]
    %v430 = vld [vmem:[#allocation2 + $0xa78] sm:$0xff]
    %v431 = vld [vmem:[#allocation2 + $0xa80] sm:$0xff]
    %v432 = vld [vmem:[#allocation2 + $0xa88] sm:$0xff]
    %v433 = vld [vmem:[#allocation2 + $0xa90] sm:$0xff]
    %v434 = vld [vmem:[#allocation2 + $0xa98] sm:$0xff]
    %v435 = vld [vmem:[#allocation2 + $0xaa0] sm:$0xff]
    %v436 = vld [vmem:[#allocation2 + $0xaa8] sm:$0xff]
    %v437 = vld [vmem:[#allocation2 + $0xab0] sm:$0xff]
    %v438 = vld [vmem:[#allocation2 + $0xab8] sm:$0xff]
    %v439 = vld [vmem:[#allocation2 + $0xac0] sm:$0xff]
    %v440 = vld [vmem:[#allocation2 + $0xac8] sm:$0xff]
    %v441 = vld [vmem:[#allocation2 + $0xad0] sm:$0xff]
    %v442 = vld [vmem:[#allocation2 + $0xad8] sm:$0xff]
    %v443 = vld [vmem:[#allocation2 + $0xae0] sm:$0xff]
    %v444 = vld [vmem:[#allocation2 + $0xae8] sm:$0xff]
    %v445 = vld [vmem:[#allocation2 + $0xaf0] sm:$0xff]
    %v446 = vld [vmem:[#allocation2 + $0xaf8] sm:$0xff]
    %v447 = vld [vmem:[#allocation2 + $0xb00] sm:$0xff]
    %v448 = vld [vmem:[#allocation2 + $0xb08] sm:$0xff]
    %v449 = vld [vmem:[#allocation2 + $0xb10] sm:$0xff]
    %v450 = vld [vmem:[#allocation2 + $0xb18] sm:$0xff]
    %v451 = vld [vmem:[#allocation2 + $0xb20] sm:$0xff]
    %v452 = vld [vmem:[#allocation2 + $0xb28] sm:$0xff]
    %v453 = vld [vmem:[#allocation2 + $0xb30] sm:$0xff]
    %v454 = vld [vmem:[#allocation2 + $0xb38] sm:$0xff]
    %v455 = vld [vmem:[#allocation2 + $0xb40] sm:$0xff]
    %v456 = vld [vmem:[#allocation2 + $0xb48] sm:$0xff]
    %v457 = vld [vmem:[#allocation2 + $0xb50] sm:$0xff]
    %v458 = vld [vmem:[#allocation2 + $0xb58] sm:$0xff]
    %v459 = vld [vmem:[#allocation2 + $0xb60] sm:$0xff]
    %v460 = vld [vmem:[#allocation2 + $0xb68] sm:$0xff]
    %v461 = vld [vmem:[#allocation2 + $0xb70] sm:$0xff]
    %v462 = vld [vmem:[#allocation2 + $0xb78] sm:$0xff]
    %v463 = vld [vmem:[#allocation2 + $0xb80] sm:$0xff]
    %v464 = vld [vmem:[#allocation2 + $0xb88] sm:$0xff]
    %v465 = vld [vmem:[#allocation2 + $0xb90] sm:$0xff]
    %v466 = vld [vmem:[#allocation2 + $0xb98] sm:$0xff]
    %v467 = vld [vmem:[#allocation2 + $0xba0] sm:$0xff]
    %v468 = vld [vmem:[#allocation2 + $0xba8] sm:$0xff]
    %v469 = vld [vmem:[#allocation2 + $0xbb0] sm:$0xff]
    %v470 = vld [vmem:[#allocation2 + $0xbb8] sm:$0xff]
    %v471 = vld [vmem:[#allocation2 + $0xbc0] sm:$0xff]
    %v472 = vld [vmem:[#allocation2 + $0xbc8] sm:$0xff]
    %v473 = vld [vmem:[#allocation2 + $0xbd0] sm:$0xff]
    %v474 = vld [vmem:[#allocation2 + $0xbd8] sm:$0xff]
    %v475 = vld [vmem:[#allocation2 + $0xbe0] sm:$0xff]
    %v476 = vld [vmem:[#allocation2 + $0xbe8] sm:$0xff]
    %v477 = vld [vmem:[#allocation2 + $0xbf0] sm:$0xff]
    %v478 = vld [vmem:[#allocation2 + $0xbf8] sm:$0xff]
    %v479 = vld [vmem:[#allocation2 + $0xc00] sm:$0xff]
    %v480 = vld [vmem:[#allocation2 + $0xc08] sm:$0xff]
    %v481 = vld [vmem:[#allocation2 + $0xc10] sm:$0xff]
    %v482 = vld [vmem:[#allocation2 + $0xc18] sm:$0xff]
    %v483 = vld [vmem:[#allocation2 + $0xc20] sm:$0xff]
    %v484 = vld [vmem:[#allocation2 + $0xc28] sm:$0xff]
    %v485 = vld [vmem:[#allocation2 + $0xc30] sm:$0xff]
    %v486 = vld [vmem:[#allocation2 + $0xc38] sm:$0xff]
    %v487 = vld [vmem:[#allocation2 + $0xc40] sm:$0xff]
    %v488 = vld [vmem:[#allocation2 + $0xc48] sm:$0xff]
    %v489 = vld [vmem:[#allocation2 + $0xc50] sm:$0xff]
    %v490 = vld [vmem:[#allocation2 + $0xc58] sm:$0xff]
    %v491 = vld [vmem:[#allocation2 + $0xc60] sm:$0xff]
    %v492 = vld [vmem:[#allocation2 + $0xc68] sm:$0xff]
    %v493 = vld [vmem:[#allocation2 + $0xc70] sm:$0xff]
    %v494 = vld [vmem:[#allocation2 + $0xc78] sm:$0xff]
    %v495 = vld [vmem:[#allocation2 + $0xc80] sm:$0xff]
    %v496 = vld [vmem:[#allocation2 + $0xc88] sm:$0xff]
    %v497 = vld [vmem:[#allocation2 + $0xc90] sm:$0xff]
    %v498 = vld [vmem:[#allocation2 + $0xc98] sm:$0xff]
    %v499 = vld [vmem:[#allocation2 + $0xca0] sm:$0xff]
    %v500 = vld [vmem:[#allocation2 + $0xca8] sm:$0xff]
    %v501 = vld [vmem:[#allocation2 + $0xcb0] sm:$0xff]
    %v502 = vld [vmem:[#allocation2 + $0xcb8] sm:$0xff]
    %v503 = vld [vmem:[#allocation2 + $0xcc0] sm:$0xff]
    %v504 = vld [vmem:[#allocation2 + $0xcc8] sm:$0xff]
    %v505 = vld [vmem:[#allocation2 + $0xcd0] sm:$0xff]
    %v506 = vld [vmem:[#allocation2 + $0xcd8] sm:$0xff]
    %v507 = vld [vmem:[#allocation2 + $0xce0] sm:$0xff]
    %v508 = vld [vmem:[#allocation2 + $0xce8] sm:$0xff]
    %v509 = vld [vmem:[#allocation2 + $0xcf0] sm:$0xff]
    %v510 = vld [vmem:[#allocation2 + $0xcf8] sm:$0xff]
    %v511 = vld [vmem:[#allocation2 + $0xd00] sm:$0xff]
    %v512 = vld [vmem:[#allocation2 + $0xd08] sm:$0xff]
    %v513 = vld [vmem:[#allocation2 + $0xd10] sm:$0xff]
    %v514 = vld [vmem:[#allocation2 + $0xd18] sm:$0xff]
    %v515 = vld [vmem:[#allocation2 + $0xd20] sm:$0xff]
    %v516 = vld [vmem:[#allocation2 + $0xd28] sm:$0xff]
    %v517 = vld [vmem:[#allocation2 + $0xd30] sm:$0xff]
    %v518 = vld [vmem:[#allocation2 + $0xd38] sm:$0xff]
    %v519 = vld [vmem:[#allocation2 + $0xd40] sm:$0xff]
    %v520 = vld [vmem:[#allocation2 + $0xd48] sm:$0xff]
    %v521 = vld [vmem:[#allocation2 + $0xd50] sm:$0xff]
    %v522 = vld [vmem:[#allocation2 + $0xd58] sm:$0xff]
    %v523 = vld [vmem:[#allocation2 + $0xd60] sm:$0xff]
    %v524 = vld [vmem:[#allocation2 + $0xd68] sm:$0xff]
    %v525 = vld [vmem:[#allocation2 + $0xd70] sm:$0xff]
    %v526 = vld [vmem:[#allocation2 + $0xd78] sm:$0xff]
    %v527 = vld [vmem:[#allocation2 + $0xd80] sm:$0xff]
    %v528 = vld [vmem:[#allocation2 + $0xd88] sm:$0xff]
    %v529 = vld [vmem:[#allocation2 + $0xd90] sm:$0xff]
    %v530 = vld [vmem:[#allocation2 + $0xd98] sm:$0xff]
    %v531 = vld [vmem:[#allocation2 + $0xda0] sm:$0xff]
    %v532 = vld [vmem:[#allocation2 + $0xda8] sm:$0xff]
    %v533 = vld [vmem:[#allocation2 + $0xdb0] sm:$0xff]
    %v534 = vld [vmem:[#allocation2 + $0xdb8] sm:$0xff]
    %v535 = vld [vmem:[#allocation2 + $0xdc0] sm:$0xff]
    %v536 = vld [vmem:[#allocation2 + $0xdc8] sm:$0xff]
    %v537 = vld [vmem:[#allocation2 + $0xdd0] sm:$0xff]
    %v538 = vld [vmem:[#allocation2 + $0xdd8] sm:$0xff]
    %v539 = vld [vmem:[#allocation2 + $0xde0] sm:$0xff]
    %v540 = vld [vmem:[#allocation2 + $0xde8] sm:$0xff]
    %v541 = vld [vmem:[#allocation2 + $0xdf0] sm:$0xff]
    %v542 = vld [vmem:[#allocation2 + $0xdf8] sm:$0xff]
    %v543 = vld [vmem:[#allocation2 + $0xe00] sm:$0xff]
    %v544 = vld [vmem:[#allocation2 + $0xe08] sm:$0xff]
    %v545 = vld [vmem:[#allocation2 + $0xe10] sm:$0xff]
    %v546 = vld [vmem:[#allocation2 + $0xe18] sm:$0xff]
    %v547 = vld [vmem:[#allocation2 + $0xe20] sm:$0xff]
    %v548 = vld [vmem:[#allocation2 + $0xe28] sm:$0xff]
    %v549 = vld [vmem:[#allocation2 + $0xe30] sm:$0xff]
    %v550 = vld [vmem:[#allocation2 + $0xe38] sm:$0xff]
    %v551 = vld [vmem:[#allocation2 + $0xe40] sm:$0xff]
    %v552 = vld [vmem:[#allocation2 + $0xe48] sm:$0xff]
    %v553 = vld [vmem:[#allocation2 + $0xe50] sm:$0xff]
    %v554 = vld [vmem:[#allocation2 + $0xe58] sm:$0xff]
    %v555 = vld [vmem:[#allocation2 + $0xe60] sm:$0xff]
    %v556 = vld [vmem:[#allocation2 + $0xe68] sm:$0xff]
    %v557 = vld [vmem:[#allocation2 + $0xe70] sm:$0xff]
    %v558 = vld [vmem:[#allocation2 + $0xe78] sm:$0xff]
    %v559 = vld [vmem:[#allocation2 + $0xe80] sm:$0xff]
    %v560 = vld [vmem:[#allocation2 + $0xe88] sm:$0xff]
    %v561 = vld [vmem:[#allocation2 + $0xe90] sm:$0xff]
    %v562 = vld [vmem:[#allocation2 + $0xe98] sm:$0xff]
    %v563 = vld [vmem:[#allocation2 + $0xea0] sm:$0xff]
    %v564 = vld [vmem:[#allocation2 + $0xea8] sm:$0xff]
    %v565 = vld [vmem:[#allocation2 + $0xeb0] sm:$0xff]
    %v566 = vld [vmem:[#allocation2 + $0xeb8] sm:$0xff]
    %v567 = vld [vmem:[#allocation2 + $0xec0] sm:$0xff]
    %v568 = vld [vmem:[#allocation2 + $0xec8] sm:$0xff]
    %v569 = vld [vmem:[#allocation2 + $0xed0] sm:$0xff]
    %v570 = vld [vmem:[#allocation2 + $0xed8] sm:$0xff]
    %v571 = vld [vmem:[#allocation2 + $0xee0] sm:$0xff]
    %v572 = vld [vmem:[#allocation2 + $0xee8] sm:$0xff]
    %v573 = vld [vmem:[#allocation2 + $0xef0] sm:$0xff]
    %v574 = vld [vmem:[#allocation2 + $0xef8] sm:$0xff]
    %v575 = vld [vmem:[#allocation2 + $0xf00] sm:$0xff]
    %v576 = vld [vmem:[#allocation2 + $0xf08] sm:$0xff]
    %v577 = vld [vmem:[#allocation2 + $0xf10] sm:$0xff]
    %v578 = vld [vmem:[#allocation2 + $0xf18] sm:$0xff]
    %v579 = vld [vmem:[#allocation2 + $0xf20] sm:$0xff]
    %v580 = vld [vmem:[#allocation2 + $0xf28] sm:$0xff]
    %v581 = vld [vmem:[#allocation2 + $0xf30] sm:$0xff]
    %v582 = vld [vmem:[#allocation2 + $0xf38] sm:$0xff]
    %v583 = vld [vmem:[#allocation2 + $0xf40] sm:$0xff]
    %v584 = vld [vmem:[#allocation2 + $0xf48] sm:$0xff]
    %v585 = vld [vmem:[#allocation2 + $0xf50] sm:$0xff]
    %v586 = vld [vmem:[#allocation2 + $0xf58] sm:$0xff]
    %v587 = vld [vmem:[#allocation2 + $0xf60] sm:$0xff]
    %v588 = vld [vmem:[#allocation2 + $0xf68] sm:$0xff]
    %v589 = vld [vmem:[#allocation2 + $0xf70] sm:$0xff]
    %v590 = vld [vmem:[#allocation2 + $0xf78] sm:$0xff]
    %v591 = vld [vmem:[#allocation2 + $0xf80] sm:$0xff]
    %v592 = vld [vmem:[#allocation2 + $0xf88] sm:$0xff]
    %v593 = vld [vmem:[#allocation2 + $0xf90] sm:$0xff]
    %v594 = vld [vmem:[#allocation2 + $0xf98] sm:$0xff]
    %v595 = vld [vmem:[#allocation2 + $0xfa0] sm:$0xff]
    %v596 = vld [vmem:[#allocation2 + $0xfa8] sm:$0xff]
    %v597 = vld [vmem:[#allocation2 + $0xfb0] sm:$0xff]
    %v598 = vld [vmem:[#allocation2 + $0xfb8] sm:$0xff]
    %v599 = vld [vmem:[#allocation2 + $0xfc0] sm:$0xff]
    %v600 = vld [vmem:[#allocation2 + $0xfc8] sm:$0xff]
    %v601 = vld [vmem:[#allocation2 + $0xfd0] sm:$0xff]
    %v602 = vld [vmem:[#allocation2 + $0xfd8] sm:$0xff]
    %v603 = vld [vmem:[#allocation2 + $0xfe0] sm:$0xff]
    %v604 = vld [vmem:[#allocation2 + $0xfe8] sm:$0xff]
    %v605 = vld [vmem:[#allocation2 + $0xff0] sm:$0xff]
    %v606 = vld [vmem:[#allocation2 + $0xff8] sm:$0xff]
    %v607 = vld [vmem:[#allocation5] sm:$0xff]
    %v609 = vlaneseq
    %v610 = vshrl.u32 %v609, 7
    %v611 = vsub.s32 0, %v610
    %v612 = vrot.slane %v607, %v611
    %v613 = vlaneseq
    %v614 = vshrl.u32 %v613, 7
    %v615 = vsub.s32 1, %v614
    %v616 = vrot.slane %v607, %v615
    %v617 = vlaneseq
    %v618 = vshrl.u32 %v617, 7
    %v619 = vsub.s32 2, %v618
    %v620 = vrot.slane %v607, %v619
    %v621 = vlaneseq
    %v622 = vshrl.u32 %v621, 7
    %v623 = vsub.s32 3, %v622
    %v624 = vrot.slane %v607, %v623
    %v625 = vlaneseq
    %v626 = vshrl.u32 %v625, 7
    %v627 = vsub.s32 4, %v626
    %v628 = vrot.slane %v607, %v627
    %v629 = vlaneseq
    %v630 = vshrl.u32 %v629, 7
    %v631 = vsub.s32 5, %v630
    %v632 = vrot.slane %v607, %v631
    %v633 = vlaneseq
    %v634 = vshrl.u32 %v633, 7
    %v635 = vsub.s32 6, %v634
    %v636 = vrot.slane %v607, %v635
    %v637 = vlaneseq
    %v638 = vshrl.u32 %v637, 7
    %v639 = vsub.s32 7, %v638
    %v640 = vrot.slane %v607, %v639
    %v1161 = vunpack.c.l.b16 %v95
    %v1162 = vunpack.c.h.b16 %v95
    %v1163 = vunpack.c.l.b16 %v96
    %v1164 = vunpack.c.h.b16 %v96
    %v1165 = vunpack.c.l.b16 %v97
    %v1166 = vunpack.c.h.b16 %v97
    %v1167 = vunpack.c.l.b16 %v98
    %v1168 = vunpack.c.h.b16 %v98
    %v1169 = vunpack.c.l.b16 %v99
    %v1170 = vunpack.c.h.b16 %v99
    %v1171 = vunpack.c.l.b16 %v100
    %v1172 = vunpack.c.h.b16 %v100
    %v1173 = vunpack.c.l.b16 %v101
    %v1174 = vunpack.c.h.b16 %v101
    %v1175 = vunpack.c.l.b16 %v102
    %v1176 = vunpack.c.h.b16 %v102
    %v1177 = vunpack.c.l.b16 %v103
    %v1178 = vunpack.c.h.b16 %v103
    %v1179 = vunpack.c.l.b16 %v104
    %v1180 = vunpack.c.h.b16 %v104
    %v1181 = vunpack.c.l.b16 %v105
    %v1182 = vunpack.c.h.b16 %v105
    %v1183 = vunpack.c.l.b16 %v106
    %v1184 = vunpack.c.h.b16 %v106
    %v1185 = vunpack.c.l.b16 %v107
    %v1186 = vunpack.c.h.b16 %v107
    %v1187 = vunpack.c.l.b16 %v108
    %v1188 = vunpack.c.h.b16 %v108
    %v1189 = vunpack.c.l.b16 %v109
    %v1190 = vunpack.c.h.b16 %v109
    %v1191 = vunpack.c.l.b16 %v110
    %v1192 = vunpack.c.h.b16 %v110
    %v1193 = vunpack.c.l.b16 %v111
    %v1194 = vunpack.c.h.b16 %v111
    %v1195 = vunpack.c.l.b16 %v112
    %v1196 = vunpack.c.h.b16 %v112
    %v1197 = vunpack.c.l.b16 %v113
    %v1198 = vunpack.c.h.b16 %v113
    %v1199 = vunpack.c.l.b16 %v114
    %v1200 = vunpack.c.h.b16 %v114
    %v1201 = vunpack.c.l.b16 %v115
    %v1202 = vunpack.c.h.b16 %v115
    %v1203 = vunpack.c.l.b16 %v116
    %v1204 = vunpack.c.h.b16 %v116
    %v1205 = vunpack.c.l.b16 %v117
    %v1206 = vunpack.c.h.b16 %v117
    %v1207 = vunpack.c.l.b16 %v118
    %v1208 = vunpack.c.h.b16 %v118
    %v1209 = vunpack.c.l.b16 %v119
    %v1210 = vunpack.c.h.b16 %v119
    %v1211 = vunpack.c.l.b16 %v120
    %v1212 = vunpack.c.h.b16 %v120
    %v1213 = vunpack.c.l.b16 %v121
    %v1214 = vunpack.c.h.b16 %v121
    %v1215 = vunpack.c.l.b16 %v122
    %v1216 = vunpack.c.h.b16 %v122
    %v1217 = vunpack.c.l.b16 %v123
    %v1218 = vunpack.c.h.b16 %v123
    %v1219 = vunpack.c.l.b16 %v124
    %v1220 = vunpack.c.h.b16 %v124
    %v1221 = vunpack.c.l.b16 %v125
    %v1222 = vunpack.c.h.b16 %v125
    %v1223 = vunpack.c.l.b16 %v126
    %v1224 = vunpack.c.h.b16 %v126
    %v1225 = vunpack.c.l.b16 %v127
    %v1226 = vunpack.c.h.b16 %v127
    %v1227 = vunpack.c.l.b16 %v128
    %v1228 = vunpack.c.h.b16 %v128
    %v1229 = vunpack.c.l.b16 %v129
    %v1230 = vunpack.c.h.b16 %v129
    %v1231 = vunpack.c.l.b16 %v130
    %v1232 = vunpack.c.h.b16 %v130
    %v1233 = vunpack.c.l.b16 %v131
    %v1234 = vunpack.c.h.b16 %v131
    %v1235 = vunpack.c.l.b16 %v132
    %v1236 = vunpack.c.h.b16 %v132
    %v1237 = vunpack.c.l.b16 %v133
    %v1238 = vunpack.c.h.b16 %v133
    %v1239 = vunpack.c.l.b16 %v134
    %v1240 = vunpack.c.h.b16 %v134
    %v1241 = vunpack.c.l.b16 %v135
    %v1242 = vunpack.c.h.b16 %v135
    %v1243 = vunpack.c.l.b16 %v136
    %v1244 = vunpack.c.h.b16 %v136
    %v1245 = vunpack.c.l.b16 %v137
    %v1246 = vunpack.c.h.b16 %v137
    %v1247 = vunpack.c.l.b16 %v138
    %v1248 = vunpack.c.h.b16 %v138
    %v1249 = vunpack.c.l.b16 %v139
    %v1250 = vunpack.c.h.b16 %v139
    %v1251 = vunpack.c.l.b16 %v140
    %v1252 = vunpack.c.h.b16 %v140
    %v1253 = vunpack.c.l.b16 %v141
    %v1254 = vunpack.c.h.b16 %v141
    %v1255 = vunpack.c.l.b16 %v142
    %v1256 = vunpack.c.h.b16 %v142
    %v1257 = vunpack.c.l.b16 %v143
    %v1258 = vunpack.c.h.b16 %v143
    %v1259 = vunpack.c.l.b16 %v144
    %v1260 = vunpack.c.h.b16 %v144
    %v1261 = vunpack.c.l.b16 %v145
    %v1262 = vunpack.c.h.b16 %v145
    %v1263 = vunpack.c.l.b16 %v146
    %v1264 = vunpack.c.h.b16 %v146
    %v1265 = vunpack.c.l.b16 %v147
    %v1266 = vunpack.c.h.b16 %v147
    %v1267 = vunpack.c.l.b16 %v148
    %v1268 = vunpack.c.h.b16 %v148
    %v1269 = vunpack.c.l.b16 %v149
    %v1270 = vunpack.c.h.b16 %v149
    %v1271 = vunpack.c.l.b16 %v150
    %v1272 = vunpack.c.h.b16 %v150
    %v1273 = vunpack.c.l.b16 %v151
    %v1274 = vunpack.c.h.b16 %v151
    %v1275 = vunpack.c.l.b16 %v152
    %v1276 = vunpack.c.h.b16 %v152
    %v1277 = vunpack.c.l.b16 %v153
    %v1278 = vunpack.c.h.b16 %v153
    %v1279 = vunpack.c.l.b16 %v154
    %v1280 = vunpack.c.h.b16 %v154
    %v1281 = vunpack.c.l.b16 %v155
    %v1282 = vunpack.c.h.b16 %v155
    %v1283 = vunpack.c.l.b16 %v156
    %v1284 = vunpack.c.h.b16 %v156
    %v1285 = vunpack.c.l.b16 %v157
    %v1286 = vunpack.c.h.b16 %v157
    %v1287 = vunpack.c.l.b16 %v158
    %v1288 = vunpack.c.h.b16 %v158
    %v1289 = vunpack.c.l.b16 %v159
    %v1290 = vunpack.c.h.b16 %v159
    %v1291 = vunpack.c.l.b16 %v160
    %v1292 = vunpack.c.h.b16 %v160
    %v1293 = vunpack.c.l.b16 %v161
    %v1294 = vunpack.c.h.b16 %v161
    %v1295 = vunpack.c.l.b16 %v162
    %v1296 = vunpack.c.h.b16 %v162
    %v1297 = vunpack.c.l.b16 %v163
    %v1298 = vunpack.c.h.b16 %v163
    %v1299 = vunpack.c.l.b16 %v164
    %v1300 = vunpack.c.h.b16 %v164
    %v1301 = vunpack.c.l.b16 %v165
    %v1302 = vunpack.c.h.b16 %v165
    %v1303 = vunpack.c.l.b16 %v166
    %v1304 = vunpack.c.h.b16 %v166
    %v1305 = vunpack.c.l.b16 %v167
    %v1306 = vunpack.c.h.b16 %v167
    %v1307 = vunpack.c.l.b16 %v168
    %v1308 = vunpack.c.h.b16 %v168
    %v1309 = vunpack.c.l.b16 %v169
    %v1310 = vunpack.c.h.b16 %v169
    %v1311 = vunpack.c.l.b16 %v170
    %v1312 = vunpack.c.h.b16 %v170
    %v1313 = vunpack.c.l.b16 %v171
    %v1314 = vunpack.c.h.b16 %v171
    %v1315 = vunpack.c.l.b16 %v172
    %v1316 = vunpack.c.h.b16 %v172
    %v1317 = vunpack.c.l.b16 %v173
    %v1318 = vunpack.c.h.b16 %v173
    %v1319 = vunpack.c.l.b16 %v174
    %v1320 = vunpack.c.h.b16 %v174
    %v1321 = vunpack.c.l.b16 %v175
    %v1322 = vunpack.c.h.b16 %v175
    %v1323 = vunpack.c.l.b16 %v176
    %v1324 = vunpack.c.h.b16 %v176
    %v1325 = vunpack.c.l.b16 %v177
    %v1326 = vunpack.c.h.b16 %v177
    %v1327 = vunpack.c.l.b16 %v178
    %v1328 = vunpack.c.h.b16 %v178
    %v1329 = vunpack.c.l.b16 %v179
    %v1330 = vunpack.c.h.b16 %v179
    %v1331 = vunpack.c.l.b16 %v180
    %v1332 = vunpack.c.h.b16 %v180
    %v1333 = vunpack.c.l.b16 %v181
    %v1334 = vunpack.c.h.b16 %v181
    %v1335 = vunpack.c.l.b16 %v182
    %v1336 = vunpack.c.h.b16 %v182
    %v1337 = vunpack.c.l.b16 %v183
    %v1338 = vunpack.c.h.b16 %v183
    %v1339 = vunpack.c.l.b16 %v184
    %v1340 = vunpack.c.h.b16 %v184
    %v1341 = vunpack.c.l.b16 %v185
    %v1342 = vunpack.c.h.b16 %v185
    %v1343 = vunpack.c.l.b16 %v186
    %v1344 = vunpack.c.h.b16 %v186
    %v1345 = vunpack.c.l.b16 %v187
    %v1346 = vunpack.c.h.b16 %v187
    %v1347 = vunpack.c.l.b16 %v188
    %v1348 = vunpack.c.h.b16 %v188
    %v1349 = vunpack.c.l.b16 %v189
    %v1350 = vunpack.c.h.b16 %v189
    %v1351 = vunpack.c.l.b16 %v190
    %v1352 = vunpack.c.h.b16 %v190
    %v1353 = vunpack.c.l.b16 %v191
    %v1354 = vunpack.c.h.b16 %v191
    %v1355 = vunpack.c.l.b16 %v192
    %v1356 = vunpack.c.h.b16 %v192
    %v1357 = vunpack.c.l.b16 %v193
    %v1358 = vunpack.c.h.b16 %v193
    %v1359 = vunpack.c.l.b16 %v194
    %v1360 = vunpack.c.h.b16 %v194
    %v1361 = vunpack.c.l.b16 %v195
    %v1362 = vunpack.c.h.b16 %v195
    %v1363 = vunpack.c.l.b16 %v196
    %v1364 = vunpack.c.h.b16 %v196
    %v1365 = vunpack.c.l.b16 %v197
    %v1366 = vunpack.c.h.b16 %v197
    %v1367 = vunpack.c.l.b16 %v198
    %v1368 = vunpack.c.h.b16 %v198
    %v1369 = vunpack.c.l.b16 %v199
    %v1370 = vunpack.c.h.b16 %v199
    %v1371 = vunpack.c.l.b16 %v200
    %v1372 = vunpack.c.h.b16 %v200
    %v1373 = vunpack.c.l.b16 %v201
    %v1374 = vunpack.c.h.b16 %v201
    %v1375 = vunpack.c.l.b16 %v202
    %v1376 = vunpack.c.h.b16 %v202
    %v1377 = vunpack.c.l.b16 %v203
    %v1378 = vunpack.c.h.b16 %v203
    %v1379 = vunpack.c.l.b16 %v204
    %v1380 = vunpack.c.h.b16 %v204
    %v1381 = vunpack.c.l.b16 %v205
    %v1382 = vunpack.c.h.b16 %v205
    %v1383 = vunpack.c.l.b16 %v206
    %v1384 = vunpack.c.h.b16 %v206
    %v1385 = vunpack.c.l.b16 %v207
    %v1386 = vunpack.c.h.b16 %v207
    %v1387 = vunpack.c.l.b16 %v208
    %v1388 = vunpack.c.h.b16 %v208
    %v1389 = vunpack.c.l.b16 %v209
    %v1390 = vunpack.c.h.b16 %v209
    %v1391 = vunpack.c.l.b16 %v210
    %v1392 = vunpack.c.h.b16 %v210
    %v1393 = vunpack.c.l.b16 %v211
    %v1394 = vunpack.c.h.b16 %v211
    %v1395 = vunpack.c.l.b16 %v212
    %v1396 = vunpack.c.h.b16 %v212
    %v1397 = vunpack.c.l.b16 %v213
    %v1398 = vunpack.c.h.b16 %v213
    %v1399 = vunpack.c.l.b16 %v214
    %v1400 = vunpack.c.h.b16 %v214
    %v1401 = vunpack.c.l.b16 %v215
    %v1402 = vunpack.c.h.b16 %v215
    %v1403 = vunpack.c.l.b16 %v216
    %v1404 = vunpack.c.h.b16 %v216
    %v1405 = vunpack.c.l.b16 %v217
    %v1406 = vunpack.c.h.b16 %v217
    %v1407 = vunpack.c.l.b16 %v218
    %v1408 = vunpack.c.h.b16 %v218
    %v1409 = vunpack.c.l.b16 %v219
    %v1410 = vunpack.c.h.b16 %v219
    %v1411 = vunpack.c.l.b16 %v220
    %v1412 = vunpack.c.h.b16 %v220
    %v1413 = vunpack.c.l.b16 %v221
    %v1414 = vunpack.c.h.b16 %v221
    %v1415 = vunpack.c.l.b16 %v222
    %v1416 = vunpack.c.h.b16 %v222
    %v1417 = vunpack.c.l.b16 %v223
    %v1418 = vunpack.c.h.b16 %v223
    %v1419 = vunpack.c.l.b16 %v224
    %v1420 = vunpack.c.h.b16 %v224
    %v1421 = vunpack.c.l.b16 %v225
    %v1422 = vunpack.c.h.b16 %v225
    %v1423 = vunpack.c.l.b16 %v226
    %v1424 = vunpack.c.h.b16 %v226
    %v1425 = vunpack.c.l.b16 %v227
    %v1426 = vunpack.c.h.b16 %v227
    %v1427 = vunpack.c.l.b16 %v228
    %v1428 = vunpack.c.h.b16 %v228
    %v1429 = vunpack.c.l.b16 %v229
    %v1430 = vunpack.c.h.b16 %v229
    %v1431 = vunpack.c.l.b16 %v230
    %v1432 = vunpack.c.h.b16 %v230
    %v1433 = vunpack.c.l.b16 %v231
    %v1434 = vunpack.c.h.b16 %v231
    %v1435 = vunpack.c.l.b16 %v232
    %v1436 = vunpack.c.h.b16 %v232
    %v1437 = vunpack.c.l.b16 %v233
    %v1438 = vunpack.c.h.b16 %v233
    %v1439 = vunpack.c.l.b16 %v234
    %v1440 = vunpack.c.h.b16 %v234
    %v1441 = vunpack.c.l.b16 %v235
    %v1442 = vunpack.c.h.b16 %v235
    %v1443 = vunpack.c.l.b16 %v236
    %v1444 = vunpack.c.h.b16 %v236
    %v1445 = vunpack.c.l.b16 %v237
    %v1446 = vunpack.c.h.b16 %v237
    %v1447 = vunpack.c.l.b16 %v238
    %v1448 = vunpack.c.h.b16 %v238
    %v1449 = vunpack.c.l.b16 %v239
    %v1450 = vunpack.c.h.b16 %v239
    %v1451 = vunpack.c.l.b16 %v240
    %v1452 = vunpack.c.h.b16 %v240
    %v1453 = vunpack.c.l.b16 %v241
    %v1454 = vunpack.c.h.b16 %v241
    %v1455 = vunpack.c.l.b16 %v242
    %v1456 = vunpack.c.h.b16 %v242
    %v1457 = vunpack.c.l.b16 %v243
    %v1458 = vunpack.c.h.b16 %v243
    %v1459 = vunpack.c.l.b16 %v244
    %v1460 = vunpack.c.h.b16 %v244
    %v1461 = vunpack.c.l.b16 %v245
    %v1462 = vunpack.c.h.b16 %v245
    %v1463 = vunpack.c.l.b16 %v246
    %v1464 = vunpack.c.h.b16 %v246
    %v1465 = vunpack.c.l.b16 %v247
    %v1466 = vunpack.c.h.b16 %v247
    %v1467 = vunpack.c.l.b16 %v248
    %v1468 = vunpack.c.h.b16 %v248
    %v1469 = vunpack.c.l.b16 %v249
    %v1470 = vunpack.c.h.b16 %v249
    %v1471 = vunpack.c.l.b16 %v250
    %v1472 = vunpack.c.h.b16 %v250
    %v1473 = vunpack.c.l.b16 %v251
    %v1474 = vunpack.c.h.b16 %v251
    %v1475 = vunpack.c.l.b16 %v252
    %v1476 = vunpack.c.h.b16 %v252
    %v1477 = vunpack.c.l.b16 %v253
    %v1478 = vunpack.c.h.b16 %v253
    %v1479 = vunpack.c.l.b16 %v254
    %v1480 = vunpack.c.h.b16 %v254
    %v1481 = vunpack.c.l.b16 %v255
    %v1482 = vunpack.c.h.b16 %v255
    %v1483 = vunpack.c.l.b16 %v256
    %v1484 = vunpack.c.h.b16 %v256
    %v1485 = vunpack.c.l.b16 %v257
    %v1486 = vunpack.c.h.b16 %v257
    %v1487 = vunpack.c.l.b16 %v258
    %v1488 = vunpack.c.h.b16 %v258
    %v1489 = vunpack.c.l.b16 %v259
    %v1490 = vunpack.c.h.b16 %v259
    %v1491 = vunpack.c.l.b16 %v260
    %v1492 = vunpack.c.h.b16 %v260
    %v1493 = vunpack.c.l.b16 %v261
    %v1494 = vunpack.c.h.b16 %v261
    %v1495 = vunpack.c.l.b16 %v262
    %v1496 = vunpack.c.h.b16 %v262
    %v1497 = vunpack.c.l.b16 %v263
    %v1498 = vunpack.c.h.b16 %v263
    %v1499 = vunpack.c.l.b16 %v264
    %v1500 = vunpack.c.h.b16 %v264
    %v1501 = vunpack.c.l.b16 %v265
    %v1502 = vunpack.c.h.b16 %v265
    %v1503 = vunpack.c.l.b16 %v266
    %v1504 = vunpack.c.h.b16 %v266
    %v1505 = vunpack.c.l.b16 %v267
    %v1506 = vunpack.c.h.b16 %v267
    %v1507 = vunpack.c.l.b16 %v268
    %v1508 = vunpack.c.h.b16 %v268
    %v1509 = vunpack.c.l.b16 %v269
    %v1510 = vunpack.c.h.b16 %v269
    %v1511 = vunpack.c.l.b16 %v270
    %v1512 = vunpack.c.h.b16 %v270
    %v1513 = vunpack.c.l.b16 %v271
    %v1514 = vunpack.c.h.b16 %v271
    %v1515 = vunpack.c.l.b16 %v272
    %v1516 = vunpack.c.h.b16 %v272
    %v1517 = vunpack.c.l.b16 %v273
    %v1518 = vunpack.c.h.b16 %v273
    %v1519 = vunpack.c.l.b16 %v274
    %v1520 = vunpack.c.h.b16 %v274
    %v1521 = vunpack.c.l.b16 %v275
    %v1522 = vunpack.c.h.b16 %v275
    %v1523 = vunpack.c.l.b16 %v276
    %v1524 = vunpack.c.h.b16 %v276
    %v1525 = vunpack.c.l.b16 %v277
    %v1526 = vunpack.c.h.b16 %v277
    %v1527 = vunpack.c.l.b16 %v278
    %v1528 = vunpack.c.h.b16 %v278
    %v1529 = vunpack.c.l.b16 %v279
    %v1530 = vunpack.c.h.b16 %v279
    %v1531 = vunpack.c.l.b16 %v280
    %v1532 = vunpack.c.h.b16 %v280
    %v1533 = vunpack.c.l.b16 %v281
    %v1534 = vunpack.c.h.b16 %v281
    %v1535 = vunpack.c.l.b16 %v282
    %v1536 = vunpack.c.h.b16 %v282
    %v1537 = vunpack.c.l.b16 %v283
    %v1538 = vunpack.c.h.b16 %v283
    %v1539 = vunpack.c.l.b16 %v284
    %v1540 = vunpack.c.h.b16 %v284
    %v1541 = vunpack.c.l.b16 %v285
    %v1542 = vunpack.c.h.b16 %v285
    %v1543 = vunpack.c.l.b16 %v286
    %v1544 = vunpack.c.h.b16 %v286
    %v1545 = vunpack.c.l.b16 %v287
    %v1546 = vunpack.c.h.b16 %v287
    %v1547 = vunpack.c.l.b16 %v288
    %v1548 = vunpack.c.h.b16 %v288
    %v1549 = vunpack.c.l.b16 %v289
    %v1550 = vunpack.c.h.b16 %v289
    %v1551 = vunpack.c.l.b16 %v290
    %v1552 = vunpack.c.h.b16 %v290
    %v1553 = vunpack.c.l.b16 %v291
    %v1554 = vunpack.c.h.b16 %v291
    %v1555 = vunpack.c.l.b16 %v292
    %v1556 = vunpack.c.h.b16 %v292
    %v1557 = vunpack.c.l.b16 %v293
    %v1558 = vunpack.c.h.b16 %v293
    %v1559 = vunpack.c.l.b16 %v294
    %v1560 = vunpack.c.h.b16 %v294
    %v1561 = vunpack.c.l.b16 %v295
    %v1562 = vunpack.c.h.b16 %v295
    %v1563 = vunpack.c.l.b16 %v296
    %v1564 = vunpack.c.h.b16 %v296
    %v1565 = vunpack.c.l.b16 %v297
    %v1566 = vunpack.c.h.b16 %v297
    %v1567 = vunpack.c.l.b16 %v298
    %v1568 = vunpack.c.h.b16 %v298
    %v1569 = vunpack.c.l.b16 %v299
    %v1570 = vunpack.c.h.b16 %v299
    %v1571 = vunpack.c.l.b16 %v300
    %v1572 = vunpack.c.h.b16 %v300
    %v1573 = vunpack.c.l.b16 %v301
    %v1574 = vunpack.c.h.b16 %v301
    %v1575 = vunpack.c.l.b16 %v302
    %v1576 = vunpack.c.h.b16 %v302
    %v1577 = vunpack.c.l.b16 %v303
    %v1578 = vunpack.c.h.b16 %v303
    %v1579 = vunpack.c.l.b16 %v304
    %v1580 = vunpack.c.h.b16 %v304
    %v1581 = vunpack.c.l.b16 %v305
    %v1582 = vunpack.c.h.b16 %v305
    %v1583 = vunpack.c.l.b16 %v306
    %v1584 = vunpack.c.h.b16 %v306
    %v1585 = vunpack.c.l.b16 %v307
    %v1586 = vunpack.c.h.b16 %v307
    %v1587 = vunpack.c.l.b16 %v308
    %v1588 = vunpack.c.h.b16 %v308
    %v1589 = vunpack.c.l.b16 %v309
    %v1590 = vunpack.c.h.b16 %v309
    %v1591 = vunpack.c.l.b16 %v310
    %v1592 = vunpack.c.h.b16 %v310
    %v1593 = vunpack.c.l.b16 %v311
    %v1594 = vunpack.c.h.b16 %v311
    %v1595 = vunpack.c.l.b16 %v312
    %v1596 = vunpack.c.h.b16 %v312
    %v1597 = vunpack.c.l.b16 %v313
    %v1598 = vunpack.c.h.b16 %v313
    %v1599 = vunpack.c.l.b16 %v314
    %v1600 = vunpack.c.h.b16 %v314
    %v1601 = vunpack.c.l.b16 %v315
    %v1602 = vunpack.c.h.b16 %v315
    %v1603 = vunpack.c.l.b16 %v316
    %v1604 = vunpack.c.h.b16 %v316
    %v1605 = vunpack.c.l.b16 %v317
    %v1606 = vunpack.c.h.b16 %v317
    %v1607 = vunpack.c.l.b16 %v318
    %v1608 = vunpack.c.h.b16 %v318
    %v1609 = vunpack.c.l.b16 %v319
    %v1610 = vunpack.c.h.b16 %v319
    %v1611 = vunpack.c.l.b16 %v320
    %v1612 = vunpack.c.h.b16 %v320
    %v1613 = vunpack.c.l.b16 %v321
    %v1614 = vunpack.c.h.b16 %v321
    %v1615 = vunpack.c.l.b16 %v322
    %v1616 = vunpack.c.h.b16 %v322
    %v1617 = vunpack.c.l.b16 %v323
    %v1618 = vunpack.c.h.b16 %v323
    %v1619 = vunpack.c.l.b16 %v324
    %v1620 = vunpack.c.h.b16 %v324
    %v1621 = vunpack.c.l.b16 %v325
    %v1622 = vunpack.c.h.b16 %v325
    %v1623 = vunpack.c.l.b16 %v326
    %v1624 = vunpack.c.h.b16 %v326
    %v1625 = vunpack.c.l.b16 %v327
    %v1626 = vunpack.c.h.b16 %v327
    %v1627 = vunpack.c.l.b16 %v328
    %v1628 = vunpack.c.h.b16 %v328
    %v1629 = vunpack.c.l.b16 %v329
    %v1630 = vunpack.c.h.b16 %v329
    %v1631 = vunpack.c.l.b16 %v330
    %v1632 = vunpack.c.h.b16 %v330
    %v1633 = vunpack.c.l.b16 %v331
    %v1634 = vunpack.c.h.b16 %v331
    %v1635 = vunpack.c.l.b16 %v332
    %v1636 = vunpack.c.h.b16 %v332
    %v1637 = vunpack.c.l.b16 %v333
    %v1638 = vunpack.c.h.b16 %v333
    %v1639 = vunpack.c.l.b16 %v334
    %v1640 = vunpack.c.h.b16 %v334
    %v1641 = vunpack.c.l.b16 %v335
    %v1642 = vunpack.c.h.b16 %v335
    %v1643 = vunpack.c.l.b16 %v336
    %v1644 = vunpack.c.h.b16 %v336
    %v1645 = vunpack.c.l.b16 %v337
    %v1646 = vunpack.c.h.b16 %v337
    %v1647 = vunpack.c.l.b16 %v338
    %v1648 = vunpack.c.h.b16 %v338
    %v1649 = vunpack.c.l.b16 %v339
    %v1650 = vunpack.c.h.b16 %v339
    %v1651 = vunpack.c.l.b16 %v340
    %v1652 = vunpack.c.h.b16 %v340
    %v1653 = vunpack.c.l.b16 %v341
    %v1654 = vunpack.c.h.b16 %v341
    %v1655 = vunpack.c.l.b16 %v342
    %v1656 = vunpack.c.h.b16 %v342
    %v1657 = vunpack.c.l.b16 %v343
    %v1658 = vunpack.c.h.b16 %v343
    %v1659 = vunpack.c.l.b16 %v344
    %v1660 = vunpack.c.h.b16 %v344
    %v1661 = vunpack.c.l.b16 %v345
    %v1662 = vunpack.c.h.b16 %v345
    %v1663 = vunpack.c.l.b16 %v346
    %v1664 = vunpack.c.h.b16 %v346
    %v1665 = vunpack.c.l.b16 %v347
    %v1666 = vunpack.c.h.b16 %v347
    %v1667 = vunpack.c.l.b16 %v348
    %v1668 = vunpack.c.h.b16 %v348
    %v1669 = vunpack.c.l.b16 %v349
    %v1670 = vunpack.c.h.b16 %v349
    %v1671 = vunpack.c.l.b16 %v350
    %v1672 = vunpack.c.h.b16 %v350
    %v1673 = vunpack.c.l.b16 %v351
    %v1674 = vunpack.c.h.b16 %v351
    %v1675 = vunpack.c.l.b16 %v352
    %v1676 = vunpack.c.h.b16 %v352
    %v1677 = vunpack.c.l.b16 %v353
    %v1678 = vunpack.c.h.b16 %v353
    %v1679 = vunpack.c.l.b16 %v354
    %v1680 = vunpack.c.h.b16 %v354
    %v1681 = vunpack.c.l.b16 %v355
    %v1682 = vunpack.c.h.b16 %v355
    %v1683 = vunpack.c.l.b16 %v356
    %v1684 = vunpack.c.h.b16 %v356
    %v1685 = vunpack.c.l.b16 %v357
    %v1686 = vunpack.c.h.b16 %v357
    %v1687 = vunpack.c.l.b16 %v358
    %v1688 = vunpack.c.h.b16 %v358
    %v1689 = vunpack.c.l.b16 %v359
    %v1690 = vunpack.c.h.b16 %v359
    %v1691 = vunpack.c.l.b16 %v360
    %v1692 = vunpack.c.h.b16 %v360
    %v1693 = vunpack.c.l.b16 %v361
    %v1694 = vunpack.c.h.b16 %v361
    %v1695 = vunpack.c.l.b16 %v362
    %v1696 = vunpack.c.h.b16 %v362
    %v1697 = vunpack.c.l.b16 %v363
    %v1698 = vunpack.c.h.b16 %v363
    %v1699 = vunpack.c.l.b16 %v364
    %v1700 = vunpack.c.h.b16 %v364
    %v1701 = vunpack.c.l.b16 %v365
    %v1702 = vunpack.c.h.b16 %v365
    %v1703 = vunpack.c.l.b16 %v366
    %v1704 = vunpack.c.h.b16 %v366
    %v1705 = vunpack.c.l.b16 %v367
    %v1706 = vunpack.c.h.b16 %v367
    %v1707 = vunpack.c.l.b16 %v368
    %v1708 = vunpack.c.h.b16 %v368
    %v1709 = vunpack.c.l.b16 %v369
    %v1710 = vunpack.c.h.b16 %v369
    %v1711 = vunpack.c.l.b16 %v370
    %v1712 = vunpack.c.h.b16 %v370
    %v1713 = vunpack.c.l.b16 %v371
    %v1714 = vunpack.c.h.b16 %v371
    %v1715 = vunpack.c.l.b16 %v372
    %v1716 = vunpack.c.h.b16 %v372
    %v1717 = vunpack.c.l.b16 %v373
    %v1718 = vunpack.c.h.b16 %v373
    %v1719 = vunpack.c.l.b16 %v374
    %v1720 = vunpack.c.h.b16 %v374
    %v1721 = vunpack.c.l.b16 %v375
    %v1722 = vunpack.c.h.b16 %v375
    %v1723 = vunpack.c.l.b16 %v376
    %v1724 = vunpack.c.h.b16 %v376
    %v1725 = vunpack.c.l.b16 %v377
    %v1726 = vunpack.c.h.b16 %v377
    %v1727 = vunpack.c.l.b16 %v378
    %v1728 = vunpack.c.h.b16 %v378
    %v1729 = vunpack.c.l.b16 %v379
    %v1730 = vunpack.c.h.b16 %v379
    %v1731 = vunpack.c.l.b16 %v380
    %v1732 = vunpack.c.h.b16 %v380
    %v1733 = vunpack.c.l.b16 %v381
    %v1734 = vunpack.c.h.b16 %v381
    %v1735 = vunpack.c.l.b16 %v382
    %v1736 = vunpack.c.h.b16 %v382
    %v1737 = vunpack.c.l.b16 %v383
    %v1738 = vunpack.c.h.b16 %v383
    %v1739 = vunpack.c.l.b16 %v384
    %v1740 = vunpack.c.h.b16 %v384
    %v1741 = vunpack.c.l.b16 %v385
    %v1742 = vunpack.c.h.b16 %v385
    %v1743 = vunpack.c.l.b16 %v386
    %v1744 = vunpack.c.h.b16 %v386
    %v1745 = vunpack.c.l.b16 %v387
    %v1746 = vunpack.c.h.b16 %v387
    %v1747 = vunpack.c.l.b16 %v388
    %v1748 = vunpack.c.h.b16 %v388
    %v1749 = vunpack.c.l.b16 %v389
    %v1750 = vunpack.c.h.b16 %v389
    %v1751 = vunpack.c.l.b16 %v390
    %v1752 = vunpack.c.h.b16 %v390
    %v1753 = vunpack.c.l.b16 %v391
    %v1754 = vunpack.c.h.b16 %v391
    %v1755 = vunpack.c.l.b16 %v392
    %v1756 = vunpack.c.h.b16 %v392
    %v1757 = vunpack.c.l.b16 %v393
    %v1758 = vunpack.c.h.b16 %v393
    %v1759 = vunpack.c.l.b16 %v394
    %v1760 = vunpack.c.h.b16 %v394
    %v1761 = vunpack.c.l.b16 %v395
    %v1762 = vunpack.c.h.b16 %v395
    %v1763 = vunpack.c.l.b16 %v396
    %v1764 = vunpack.c.h.b16 %v396
    %v1765 = vunpack.c.l.b16 %v397
    %v1766 = vunpack.c.h.b16 %v397
    %v1767 = vunpack.c.l.b16 %v398
    %v1768 = vunpack.c.h.b16 %v398
    %v1769 = vunpack.c.l.b16 %v399
    %v1770 = vunpack.c.h.b16 %v399
    %v1771 = vunpack.c.l.b16 %v400
    %v1772 = vunpack.c.h.b16 %v400
    %v1773 = vunpack.c.l.b16 %v401
    %v1774 = vunpack.c.h.b16 %v401
    %v1775 = vunpack.c.l.b16 %v402
    %v1776 = vunpack.c.h.b16 %v402
    %v1777 = vunpack.c.l.b16 %v403
    %v1778 = vunpack.c.h.b16 %v403
    %v1779 = vunpack.c.l.b16 %v404
    %v1780 = vunpack.c.h.b16 %v404
    %v1781 = vunpack.c.l.b16 %v405
    %v1782 = vunpack.c.h.b16 %v405
    %v1783 = vunpack.c.l.b16 %v406
    %v1784 = vunpack.c.h.b16 %v406
    %v1785 = vunpack.c.l.b16 %v407
    %v1786 = vunpack.c.h.b16 %v407
    %v1787 = vunpack.c.l.b16 %v408
    %v1788 = vunpack.c.h.b16 %v408
    %v1789 = vunpack.c.l.b16 %v409
    %v1790 = vunpack.c.h.b16 %v409
    %v1791 = vunpack.c.l.b16 %v410
    %v1792 = vunpack.c.h.b16 %v410
    %v1793 = vunpack.c.l.b16 %v411
    %v1794 = vunpack.c.h.b16 %v411
    %v1795 = vunpack.c.l.b16 %v412
    %v1796 = vunpack.c.h.b16 %v412
    %v1797 = vunpack.c.l.b16 %v413
    %v1798 = vunpack.c.h.b16 %v413
    %v1799 = vunpack.c.l.b16 %v414
    %v1800 = vunpack.c.h.b16 %v414
    %v1801 = vunpack.c.l.b16 %v415
    %v1802 = vunpack.c.h.b16 %v415
    %v1803 = vunpack.c.l.b16 %v416
    %v1804 = vunpack.c.h.b16 %v416
    %v1805 = vunpack.c.l.b16 %v417
    %v1806 = vunpack.c.h.b16 %v417
    %v1807 = vunpack.c.l.b16 %v418
    %v1808 = vunpack.c.h.b16 %v418
    %v1809 = vunpack.c.l.b16 %v419
    %v1810 = vunpack.c.h.b16 %v419
    %v1811 = vunpack.c.l.b16 %v420
    %v1812 = vunpack.c.h.b16 %v420
    %v1813 = vunpack.c.l.b16 %v421
    %v1814 = vunpack.c.h.b16 %v421
    %v1815 = vunpack.c.l.b16 %v422
    %v1816 = vunpack.c.h.b16 %v422
    %v1817 = vunpack.c.l.b16 %v423
    %v1818 = vunpack.c.h.b16 %v423
    %v1819 = vunpack.c.l.b16 %v424
    %v1820 = vunpack.c.h.b16 %v424
    %v1821 = vunpack.c.l.b16 %v425
    %v1822 = vunpack.c.h.b16 %v425
    %v1823 = vunpack.c.l.b16 %v426
    %v1824 = vunpack.c.h.b16 %v426
    %v1825 = vunpack.c.l.b16 %v427
    %v1826 = vunpack.c.h.b16 %v427
    %v1827 = vunpack.c.l.b16 %v428
    %v1828 = vunpack.c.h.b16 %v428
    %v1829 = vunpack.c.l.b16 %v429
    %v1830 = vunpack.c.h.b16 %v429
    %v1831 = vunpack.c.l.b16 %v430
    %v1832 = vunpack.c.h.b16 %v430
    %v1833 = vunpack.c.l.b16 %v431
    %v1834 = vunpack.c.h.b16 %v431
    %v1835 = vunpack.c.l.b16 %v432
    %v1836 = vunpack.c.h.b16 %v432
    %v1837 = vunpack.c.l.b16 %v433
    %v1838 = vunpack.c.h.b16 %v433
    %v1839 = vunpack.c.l.b16 %v434
    %v1840 = vunpack.c.h.b16 %v434
    %v1841 = vunpack.c.l.b16 %v435
    %v1842 = vunpack.c.h.b16 %v435
    %v1843 = vunpack.c.l.b16 %v436
    %v1844 = vunpack.c.h.b16 %v436
    %v1845 = vunpack.c.l.b16 %v437
    %v1846 = vunpack.c.h.b16 %v437
    %v1847 = vunpack.c.l.b16 %v438
    %v1848 = vunpack.c.h.b16 %v438
    %v1849 = vunpack.c.l.b16 %v439
    %v1850 = vunpack.c.h.b16 %v439
    %v1851 = vunpack.c.l.b16 %v440
    %v1852 = vunpack.c.h.b16 %v440
    %v1853 = vunpack.c.l.b16 %v441
    %v1854 = vunpack.c.h.b16 %v441
    %v1855 = vunpack.c.l.b16 %v442
    %v1856 = vunpack.c.h.b16 %v442
    %v1857 = vunpack.c.l.b16 %v443
    %v1858 = vunpack.c.h.b16 %v443
    %v1859 = vunpack.c.l.b16 %v444
    %v1860 = vunpack.c.h.b16 %v444
    %v1861 = vunpack.c.l.b16 %v445
    %v1862 = vunpack.c.h.b16 %v445
    %v1863 = vunpack.c.l.b16 %v446
    %v1864 = vunpack.c.h.b16 %v446
    %v1865 = vunpack.c.l.b16 %v447
    %v1866 = vunpack.c.h.b16 %v447
    %v1867 = vunpack.c.l.b16 %v448
    %v1868 = vunpack.c.h.b16 %v448
    %v1869 = vunpack.c.l.b16 %v449
    %v1870 = vunpack.c.h.b16 %v449
    %v1871 = vunpack.c.l.b16 %v450
    %v1872 = vunpack.c.h.b16 %v450
    %v1873 = vunpack.c.l.b16 %v451
    %v1874 = vunpack.c.h.b16 %v451
    %v1875 = vunpack.c.l.b16 %v452
    %v1876 = vunpack.c.h.b16 %v452
    %v1877 = vunpack.c.l.b16 %v453
    %v1878 = vunpack.c.h.b16 %v453
    %v1879 = vunpack.c.l.b16 %v454
    %v1880 = vunpack.c.h.b16 %v454
    %v1881 = vunpack.c.l.b16 %v455
    %v1882 = vunpack.c.h.b16 %v455
    %v1883 = vunpack.c.l.b16 %v456
    %v1884 = vunpack.c.h.b16 %v456
    %v1885 = vunpack.c.l.b16 %v457
    %v1886 = vunpack.c.h.b16 %v457
    %v1887 = vunpack.c.l.b16 %v458
    %v1888 = vunpack.c.h.b16 %v458
    %v1889 = vunpack.c.l.b16 %v459
    %v1890 = vunpack.c.h.b16 %v459
    %v1891 = vunpack.c.l.b16 %v460
    %v1892 = vunpack.c.h.b16 %v460
    %v1893 = vunpack.c.l.b16 %v461
    %v1894 = vunpack.c.h.b16 %v461
    %v1895 = vunpack.c.l.b16 %v462
    %v1896 = vunpack.c.h.b16 %v462
    %v1897 = vunpack.c.l.b16 %v463
    %v1898 = vunpack.c.h.b16 %v463
    %v1899 = vunpack.c.l.b16 %v464
    %v1900 = vunpack.c.h.b16 %v464
    %v1901 = vunpack.c.l.b16 %v465
    %v1902 = vunpack.c.h.b16 %v465
    %v1903 = vunpack.c.l.b16 %v466
    %v1904 = vunpack.c.h.b16 %v466
    %v1905 = vunpack.c.l.b16 %v467
    %v1906 = vunpack.c.h.b16 %v467
    %v1907 = vunpack.c.l.b16 %v468
    %v1908 = vunpack.c.h.b16 %v468
    %v1909 = vunpack.c.l.b16 %v469
    %v1910 = vunpack.c.h.b16 %v469
    %v1911 = vunpack.c.l.b16 %v470
    %v1912 = vunpack.c.h.b16 %v470
    %v1913 = vunpack.c.l.b16 %v471
    %v1914 = vunpack.c.h.b16 %v471
    %v1915 = vunpack.c.l.b16 %v472
    %v1916 = vunpack.c.h.b16 %v472
    %v1917 = vunpack.c.l.b16 %v473
    %v1918 = vunpack.c.h.b16 %v473
    %v1919 = vunpack.c.l.b16 %v474
    %v1920 = vunpack.c.h.b16 %v474
    %v1921 = vunpack.c.l.b16 %v475
    %v1922 = vunpack.c.h.b16 %v475
    %v1923 = vunpack.c.l.b16 %v476
    %v1924 = vunpack.c.h.b16 %v476
    %v1925 = vunpack.c.l.b16 %v477
    %v1926 = vunpack.c.h.b16 %v477
    %v1927 = vunpack.c.l.b16 %v478
    %v1928 = vunpack.c.h.b16 %v478
    %v1929 = vunpack.c.l.b16 %v479
    %v1930 = vunpack.c.h.b16 %v479
    %v1931 = vunpack.c.l.b16 %v480
    %v1932 = vunpack.c.h.b16 %v480
    %v1933 = vunpack.c.l.b16 %v481
    %v1934 = vunpack.c.h.b16 %v481
    %v1935 = vunpack.c.l.b16 %v482
    %v1936 = vunpack.c.h.b16 %v482
    %v1937 = vunpack.c.l.b16 %v483
    %v1938 = vunpack.c.h.b16 %v483
    %v1939 = vunpack.c.l.b16 %v484
    %v1940 = vunpack.c.h.b16 %v484
    %v1941 = vunpack.c.l.b16 %v485
    %v1942 = vunpack.c.h.b16 %v485
    %v1943 = vunpack.c.l.b16 %v486
    %v1944 = vunpack.c.h.b16 %v486
    %v1945 = vunpack.c.l.b16 %v487
    %v1946 = vunpack.c.h.b16 %v487
    %v1947 = vunpack.c.l.b16 %v488
    %v1948 = vunpack.c.h.b16 %v488
    %v1949 = vunpack.c.l.b16 %v489
    %v1950 = vunpack.c.h.b16 %v489
    %v1951 = vunpack.c.l.b16 %v490
    %v1952 = vunpack.c.h.b16 %v490
    %v1953 = vunpack.c.l.b16 %v491
    %v1954 = vunpack.c.h.b16 %v491
    %v1955 = vunpack.c.l.b16 %v492
    %v1956 = vunpack.c.h.b16 %v492
    %v1957 = vunpack.c.l.b16 %v493
    %v1958 = vunpack.c.h.b16 %v493
    %v1959 = vunpack.c.l.b16 %v494
    %v1960 = vunpack.c.h.b16 %v494
    %v1961 = vunpack.c.l.b16 %v495
    %v1962 = vunpack.c.h.b16 %v495
    %v1963 = vunpack.c.l.b16 %v496
    %v1964 = vunpack.c.h.b16 %v496
    %v1965 = vunpack.c.l.b16 %v497
    %v1966 = vunpack.c.h.b16 %v497
    %v1967 = vunpack.c.l.b16 %v498
    %v1968 = vunpack.c.h.b16 %v498
    %v1969 = vunpack.c.l.b16 %v499
    %v1970 = vunpack.c.h.b16 %v499
    %v1971 = vunpack.c.l.b16 %v500
    %v1972 = vunpack.c.h.b16 %v500
    %v1973 = vunpack.c.l.b16 %v501
    %v1974 = vunpack.c.h.b16 %v501
    %v1975 = vunpack.c.l.b16 %v502
    %v1976 = vunpack.c.h.b16 %v502
    %v1977 = vunpack.c.l.b16 %v503
    %v1978 = vunpack.c.h.b16 %v503
    %v1979 = vunpack.c.l.b16 %v504
    %v1980 = vunpack.c.h.b16 %v504
    %v1981 = vunpack.c.l.b16 %v505
    %v1982 = vunpack.c.h.b16 %v505
    %v1983 = vunpack.c.l.b16 %v506
    %v1984 = vunpack.c.h.b16 %v506
    %v1985 = vunpack.c.l.b16 %v507
    %v1986 = vunpack.c.h.b16 %v507
    %v1987 = vunpack.c.l.b16 %v508
    %v1988 = vunpack.c.h.b16 %v508
    %v1989 = vunpack.c.l.b16 %v509
    %v1990 = vunpack.c.h.b16 %v509
    %v1991 = vunpack.c.l.b16 %v510
    %v1992 = vunpack.c.h.b16 %v510
    %v1993 = vunpack.c.l.b16 %v511
    %v1994 = vunpack.c.h.b16 %v511
    %v1995 = vunpack.c.l.b16 %v512
    %v1996 = vunpack.c.h.b16 %v512
    %v1997 = vunpack.c.l.b16 %v513
    %v1998 = vunpack.c.h.b16 %v513
    %v1999 = vunpack.c.l.b16 %v514
    %v2000 = vunpack.c.h.b16 %v514
    %v2001 = vunpack.c.l.b16 %v515
    %v2002 = vunpack.c.h.b16 %v515
    %v2003 = vunpack.c.l.b16 %v516
    %v2004 = vunpack.c.h.b16 %v516
    %v2005 = vunpack.c.l.b16 %v517
    %v2006 = vunpack.c.h.b16 %v517
    %v2007 = vunpack.c.l.b16 %v518
    %v2008 = vunpack.c.h.b16 %v518
    %v2009 = vunpack.c.l.b16 %v519
    %v2010 = vunpack.c.h.b16 %v519
    %v2011 = vunpack.c.l.b16 %v520
    %v2012 = vunpack.c.h.b16 %v520
    %v2013 = vunpack.c.l.b16 %v521
    %v2014 = vunpack.c.h.b16 %v521
    %v2015 = vunpack.c.l.b16 %v522
    %v2016 = vunpack.c.h.b16 %v522
    %v2017 = vunpack.c.l.b16 %v523
    %v2018 = vunpack.c.h.b16 %v523
    %v2019 = vunpack.c.l.b16 %v524
    %v2020 = vunpack.c.h.b16 %v524
    %v2021 = vunpack.c.l.b16 %v525
    %v2022 = vunpack.c.h.b16 %v525
    %v2023 = vunpack.c.l.b16 %v526
    %v2024 = vunpack.c.h.b16 %v526
    %v2025 = vunpack.c.l.b16 %v527
    %v2026 = vunpack.c.h.b16 %v527
    %v2027 = vunpack.c.l.b16 %v528
    %v2028 = vunpack.c.h.b16 %v528
    %v2029 = vunpack.c.l.b16 %v529
    %v2030 = vunpack.c.h.b16 %v529
    %v2031 = vunpack.c.l.b16 %v530
    %v2032 = vunpack.c.h.b16 %v530
    %v2033 = vunpack.c.l.b16 %v531
    %v2034 = vunpack.c.h.b16 %v531
    %v2035 = vunpack.c.l.b16 %v532
    %v2036 = vunpack.c.h.b16 %v532
    %v2037 = vunpack.c.l.b16 %v533
    %v2038 = vunpack.c.h.b16 %v533
    %v2039 = vunpack.c.l.b16 %v534
    %v2040 = vunpack.c.h.b16 %v534
    %v2041 = vunpack.c.l.b16 %v535
    %v2042 = vunpack.c.h.b16 %v535
    %v2043 = vunpack.c.l.b16 %v536
    %v2044 = vunpack.c.h.b16 %v536
    %v2045 = vunpack.c.l.b16 %v537
    %v2046 = vunpack.c.h.b16 %v537
    %v2047 = vunpack.c.l.b16 %v538
    %v2048 = vunpack.c.h.b16 %v538
    %v2049 = vunpack.c.l.b16 %v539
    %v2050 = vunpack.c.h.b16 %v539
    %v2051 = vunpack.c.l.b16 %v540
    %v2052 = vunpack.c.h.b16 %v540
    %v2053 = vunpack.c.l.b16 %v541
    %v2054 = vunpack.c.h.b16 %v541
    %v2055 = vunpack.c.l.b16 %v542
    %v2056 = vunpack.c.h.b16 %v542
    %v2057 = vunpack.c.l.b16 %v543
    %v2058 = vunpack.c.h.b16 %v543
    %v2059 = vunpack.c.l.b16 %v544
    %v2060 = vunpack.c.h.b16 %v544
    %v2061 = vunpack.c.l.b16 %v545
    %v2062 = vunpack.c.h.b16 %v545
    %v2063 = vunpack.c.l.b16 %v546
    %v2064 = vunpack.c.h.b16 %v546
    %v2065 = vunpack.c.l.b16 %v547
    %v2066 = vunpack.c.h.b16 %v547
    %v2067 = vunpack.c.l.b16 %v548
    %v2068 = vunpack.c.h.b16 %v548
    %v2069 = vunpack.c.l.b16 %v549
    %v2070 = vunpack.c.h.b16 %v549
    %v2071 = vunpack.c.l.b16 %v550
    %v2072 = vunpack.c.h.b16 %v550
    %v2073 = vunpack.c.l.b16 %v551
    %v2074 = vunpack.c.h.b16 %v551
    %v2075 = vunpack.c.l.b16 %v552
    %v2076 = vunpack.c.h.b16 %v552
    %v2077 = vunpack.c.l.b16 %v553
    %v2078 = vunpack.c.h.b16 %v553
    %v2079 = vunpack.c.l.b16 %v554
    %v2080 = vunpack.c.h.b16 %v554
    %v2081 = vunpack.c.l.b16 %v555
    %v2082 = vunpack.c.h.b16 %v555
    %v2083 = vunpack.c.l.b16 %v556
    %v2084 = vunpack.c.h.b16 %v556
    %v2085 = vunpack.c.l.b16 %v557
    %v2086 = vunpack.c.h.b16 %v557
    %v2087 = vunpack.c.l.b16 %v558
    %v2088 = vunpack.c.h.b16 %v558
    %v2089 = vunpack.c.l.b16 %v559
    %v2090 = vunpack.c.h.b16 %v559
    %v2091 = vunpack.c.l.b16 %v560
    %v2092 = vunpack.c.h.b16 %v560
    %v2093 = vunpack.c.l.b16 %v561
    %v2094 = vunpack.c.h.b16 %v561
    %v2095 = vunpack.c.l.b16 %v562
    %v2096 = vunpack.c.h.b16 %v562
    %v2097 = vunpack.c.l.b16 %v563
    %v2098 = vunpack.c.h.b16 %v563
    %v2099 = vunpack.c.l.b16 %v564
    %v2100 = vunpack.c.h.b16 %v564
    %v2101 = vunpack.c.l.b16 %v565
    %v2102 = vunpack.c.h.b16 %v565
    %v2103 = vunpack.c.l.b16 %v566
    %v2104 = vunpack.c.h.b16 %v566
    %v2105 = vunpack.c.l.b16 %v567
    %v2106 = vunpack.c.h.b16 %v567
    %v2107 = vunpack.c.l.b16 %v568
    %v2108 = vunpack.c.h.b16 %v568
    %v2109 = vunpack.c.l.b16 %v569
    %v2110 = vunpack.c.h.b16 %v569
    %v2111 = vunpack.c.l.b16 %v570
    %v2112 = vunpack.c.h.b16 %v570
    %v2113 = vunpack.c.l.b16 %v571
    %v2114 = vunpack.c.h.b16 %v571
    %v2115 = vunpack.c.l.b16 %v572
    %v2116 = vunpack.c.h.b16 %v572
    %v2117 = vunpack.c.l.b16 %v573
    %v2118 = vunpack.c.h.b16 %v573
    %v2119 = vunpack.c.l.b16 %v574
    %v2120 = vunpack.c.h.b16 %v574
    %v2121 = vunpack.c.l.b16 %v575
    %v2122 = vunpack.c.h.b16 %v575
    %v2123 = vunpack.c.l.b16 %v576
    %v2124 = vunpack.c.h.b16 %v576
    %v2125 = vunpack.c.l.b16 %v577
    %v2126 = vunpack.c.h.b16 %v577
    %v2127 = vunpack.c.l.b16 %v578
    %v2128 = vunpack.c.h.b16 %v578
    %v2129 = vunpack.c.l.b16 %v579
    %v2130 = vunpack.c.h.b16 %v579
    %v2131 = vunpack.c.l.b16 %v580
    %v2132 = vunpack.c.h.b16 %v580
    %v2133 = vunpack.c.l.b16 %v581
    %v2134 = vunpack.c.h.b16 %v581
    %v2135 = vunpack.c.l.b16 %v582
    %v2136 = vunpack.c.h.b16 %v582
    %v2137 = vunpack.c.l.b16 %v583
    %v2138 = vunpack.c.h.b16 %v583
    %v2139 = vunpack.c.l.b16 %v584
    %v2140 = vunpack.c.h.b16 %v584
    %v2141 = vunpack.c.l.b16 %v585
    %v2142 = vunpack.c.h.b16 %v585
    %v2143 = vunpack.c.l.b16 %v586
    %v2144 = vunpack.c.h.b16 %v586
    %v2145 = vunpack.c.l.b16 %v587
    %v2146 = vunpack.c.h.b16 %v587
    %v2147 = vunpack.c.l.b16 %v588
    %v2148 = vunpack.c.h.b16 %v588
    %v2149 = vunpack.c.l.b16 %v589
    %v2150 = vunpack.c.h.b16 %v589
    %v2151 = vunpack.c.l.b16 %v590
    %v2152 = vunpack.c.h.b16 %v590
    %v2153 = vunpack.c.l.b16 %v591
    %v2154 = vunpack.c.h.b16 %v591
    %v2155 = vunpack.c.l.b16 %v592
    %v2156 = vunpack.c.h.b16 %v592
    %v2157 = vunpack.c.l.b16 %v593
    %v2158 = vunpack.c.h.b16 %v593
    %v2159 = vunpack.c.l.b16 %v594
    %v2160 = vunpack.c.h.b16 %v594
    %v2161 = vunpack.c.l.b16 %v595
    %v2162 = vunpack.c.h.b16 %v595
    %v2163 = vunpack.c.l.b16 %v596
    %v2164 = vunpack.c.h.b16 %v596
    %v2165 = vunpack.c.l.b16 %v597
    %v2166 = vunpack.c.h.b16 %v597
    %v2167 = vunpack.c.l.b16 %v598
    %v2168 = vunpack.c.h.b16 %v598
    %v2169 = vunpack.c.l.b16 %v599
    %v2170 = vunpack.c.h.b16 %v599
    %v2171 = vunpack.c.l.b16 %v600
    %v2172 = vunpack.c.h.b16 %v600
    %v2173 = vunpack.c.l.b16 %v601
    %v2174 = vunpack.c.h.b16 %v601
    %v2175 = vunpack.c.l.b16 %v602
    %v2176 = vunpack.c.h.b16 %v602
    %v2177 = vunpack.c.l.b16 %v603
    %v2178 = vunpack.c.h.b16 %v603
    %v2179 = vunpack.c.l.b16 %v604
    %v2180 = vunpack.c.h.b16 %v604
    %v2181 = vunpack.c.l.b16 %v605
    %v2182 = vunpack.c.h.b16 %v605
    %v2183 = vunpack.c.l.b16 %v606
    %v2184 = vunpack.c.h.b16 %v606
    %v2185 = vpack.c.b16 %v1169, %v1161
    %v2186 = vpack.c.b16 %v1170, %v1162
    %v2187 = vpack.c.b16 %v1171, %v1163
    %v2188 = vpack.c.b16 %v1172, %v1164
    %v2189 = vpack.c.b16 %v1173, %v1165
    %v2190 = vpack.c.b16 %v1174, %v1166
    %v2191 = vpack.c.b16 %v1175, %v1167
    %v2192 = vpack.c.b16 %v1176, %v1168
    %v2193 = vpack.c.b16 %v1185, %v1177
    %v2194 = vpack.c.b16 %v1186, %v1178
    %v2195 = vpack.c.b16 %v1187, %v1179
    %v2196 = vpack.c.b16 %v1188, %v1180
    %v2197 = vpack.c.b16 %v1189, %v1181
    %v2198 = vpack.c.b16 %v1190, %v1182
    %v2199 = vpack.c.b16 %v1191, %v1183
    %v2200 = vpack.c.b16 %v1192, %v1184
    %v2201 = vpack.c.b16 %v1201, %v1193
    %v2202 = vpack.c.b16 %v1202, %v1194
    %v2203 = vpack.c.b16 %v1203, %v1195
    %v2204 = vpack.c.b16 %v1204, %v1196
    %v2205 = vpack.c.b16 %v1205, %v1197
    %v2206 = vpack.c.b16 %v1206, %v1198
    %v2207 = vpack.c.b16 %v1207, %v1199
    %v2208 = vpack.c.b16 %v1208, %v1200
    %v2209 = vpack.c.b16 %v1217, %v1209
    %v2210 = vpack.c.b16 %v1218, %v1210
    %v2211 = vpack.c.b16 %v1219, %v1211
    %v2212 = vpack.c.b16 %v1220, %v1212
    %v2213 = vpack.c.b16 %v1221, %v1213
    %v2214 = vpack.c.b16 %v1222, %v1214
    %v2215 = vpack.c.b16 %v1223, %v1215
    %v2216 = vpack.c.b16 %v1224, %v1216
    %v2217 = vpack.c.b16 %v1233, %v1225
    %v2218 = vpack.c.b16 %v1234, %v1226
    %v2219 = vpack.c.b16 %v1235, %v1227
    %v2220 = vpack.c.b16 %v1236, %v1228
    %v2221 = vpack.c.b16 %v1237, %v1229
    %v2222 = vpack.c.b16 %v1238, %v1230
    %v2223 = vpack.c.b16 %v1239, %v1231
    %v2224 = vpack.c.b16 %v1240, %v1232
    %v2225 = vpack.c.b16 %v1249, %v1241
    %v2226 = vpack.c.b16 %v1250, %v1242
    %v2227 = vpack.c.b16 %v1251, %v1243
    %v2228 = vpack.c.b16 %v1252, %v1244
    %v2229 = vpack.c.b16 %v1253, %v1245
    %v2230 = vpack.c.b16 %v1254, %v1246
    %v2231 = vpack.c.b16 %v1255, %v1247
    %v2232 = vpack.c.b16 %v1256, %v1248
    %v2233 = vpack.c.b16 %v1265, %v1257
    %v2234 = vpack.c.b16 %v1266, %v1258
    %v2235 = vpack.c.b16 %v1267, %v1259
    %v2236 = vpack.c.b16 %v1268, %v1260
    %v2237 = vpack.c.b16 %v1269, %v1261
    %v2238 = vpack.c.b16 %v1270, %v1262
    %v2239 = vpack.c.b16 %v1271, %v1263
    %v2240 = vpack.c.b16 %v1272, %v1264
    %v2241 = vpack.c.b16 %v1281, %v1273
    %v2242 = vpack.c.b16 %v1282, %v1274
    %v2243 = vpack.c.b16 %v1283, %v1275
    %v2244 = vpack.c.b16 %v1284, %v1276
    %v2245 = vpack.c.b16 %v1285, %v1277
    %v2246 = vpack.c.b16 %v1286, %v1278
    %v2247 = vpack.c.b16 %v1287, %v1279
    %v2248 = vpack.c.b16 %v1288, %v1280
    %v2249 = vpack.c.b16 %v1297, %v1289
    %v2250 = vpack.c.b16 %v1298, %v1290
    %v2251 = vpack.c.b16 %v1299, %v1291
    %v2252 = vpack.c.b16 %v1300, %v1292
    %v2253 = vpack.c.b16 %v1301, %v1293
    %v2254 = vpack.c.b16 %v1302, %v1294
    %v2255 = vpack.c.b16 %v1303, %v1295
    %v2256 = vpack.c.b16 %v1304, %v1296
    %v2257 = vpack.c.b16 %v1313, %v1305
    %v2258 = vpack.c.b16 %v1314, %v1306
    %v2259 = vpack.c.b16 %v1315, %v1307
    %v2260 = vpack.c.b16 %v1316, %v1308
    %v2261 = vpack.c.b16 %v1317, %v1309
    %v2262 = vpack.c.b16 %v1318, %v1310
    %v2263 = vpack.c.b16 %v1319, %v1311
    %v2264 = vpack.c.b16 %v1320, %v1312
    %v2265 = vpack.c.b16 %v1329, %v1321
    %v2266 = vpack.c.b16 %v1330, %v1322
    %v2267 = vpack.c.b16 %v1331, %v1323
    %v2268 = vpack.c.b16 %v1332, %v1324
    %v2269 = vpack.c.b16 %v1333, %v1325
    %v2270 = vpack.c.b16 %v1334, %v1326
    %v2271 = vpack.c.b16 %v1335, %v1327
    %v2272 = vpack.c.b16 %v1336, %v1328
    %v2273 = vpack.c.b16 %v1345, %v1337
    %v2274 = vpack.c.b16 %v1346, %v1338
    %v2275 = vpack.c.b16 %v1347, %v1339
    %v2276 = vpack.c.b16 %v1348, %v1340
    %v2277 = vpack.c.b16 %v1349, %v1341
    %v2278 = vpack.c.b16 %v1350, %v1342
    %v2279 = vpack.c.b16 %v1351, %v1343
    %v2280 = vpack.c.b16 %v1352, %v1344
    %v2281 = vpack.c.b16 %v1361, %v1353
    %v2282 = vpack.c.b16 %v1362, %v1354
    %v2283 = vpack.c.b16 %v1363, %v1355
    %v2284 = vpack.c.b16 %v1364, %v1356
    %v2285 = vpack.c.b16 %v1365, %v1357
    %v2286 = vpack.c.b16 %v1366, %v1358
    %v2287 = vpack.c.b16 %v1367, %v1359
    %v2288 = vpack.c.b16 %v1368, %v1360
    %v2289 = vpack.c.b16 %v1377, %v1369
    %v2290 = vpack.c.b16 %v1378, %v1370
    %v2291 = vpack.c.b16 %v1379, %v1371
    %v2292 = vpack.c.b16 %v1380, %v1372
    %v2293 = vpack.c.b16 %v1381, %v1373
    %v2294 = vpack.c.b16 %v1382, %v1374
    %v2295 = vpack.c.b16 %v1383, %v1375
    %v2296 = vpack.c.b16 %v1384, %v1376
    %v2297 = vpack.c.b16 %v1393, %v1385
    %v2298 = vpack.c.b16 %v1394, %v1386
    %v2299 = vpack.c.b16 %v1395, %v1387
    %v2300 = vpack.c.b16 %v1396, %v1388
    %v2301 = vpack.c.b16 %v1397, %v1389
    %v2302 = vpack.c.b16 %v1398, %v1390
    %v2303 = vpack.c.b16 %v1399, %v1391
    %v2304 = vpack.c.b16 %v1400, %v1392
    %v2305 = vpack.c.b16 %v1409, %v1401
    %v2306 = vpack.c.b16 %v1410, %v1402
    %v2307 = vpack.c.b16 %v1411, %v1403
    %v2308 = vpack.c.b16 %v1412, %v1404
    %v2309 = vpack.c.b16 %v1413, %v1405
    %v2310 = vpack.c.b16 %v1414, %v1406
    %v2311 = vpack.c.b16 %v1415, %v1407
    %v2312 = vpack.c.b16 %v1416, %v1408
    %v2313 = vpack.c.b16 %v1425, %v1417
    %v2314 = vpack.c.b16 %v1426, %v1418
    %v2315 = vpack.c.b16 %v1427, %v1419
    %v2316 = vpack.c.b16 %v1428, %v1420
    %v2317 = vpack.c.b16 %v1429, %v1421
    %v2318 = vpack.c.b16 %v1430, %v1422
    %v2319 = vpack.c.b16 %v1431, %v1423
    %v2320 = vpack.c.b16 %v1432, %v1424
    %v2321 = vpack.c.b16 %v1441, %v1433
    %v2322 = vpack.c.b16 %v1442, %v1434
    %v2323 = vpack.c.b16 %v1443, %v1435
    %v2324 = vpack.c.b16 %v1444, %v1436
    %v2325 = vpack.c.b16 %v1445, %v1437
    %v2326 = vpack.c.b16 %v1446, %v1438
    %v2327 = vpack.c.b16 %v1447, %v1439
    %v2328 = vpack.c.b16 %v1448, %v1440
    %v2329 = vpack.c.b16 %v1457, %v1449
    %v2330 = vpack.c.b16 %v1458, %v1450
    %v2331 = vpack.c.b16 %v1459, %v1451
    %v2332 = vpack.c.b16 %v1460, %v1452
    %v2333 = vpack.c.b16 %v1461, %v1453
    %v2334 = vpack.c.b16 %v1462, %v1454
    %v2335 = vpack.c.b16 %v1463, %v1455
    %v2336 = vpack.c.b16 %v1464, %v1456
    %v2337 = vpack.c.b16 %v1473, %v1465
    %v2338 = vpack.c.b16 %v1474, %v1466
    %v2339 = vpack.c.b16 %v1475, %v1467
    %v2340 = vpack.c.b16 %v1476, %v1468
    %v2341 = vpack.c.b16 %v1477, %v1469
    %v2342 = vpack.c.b16 %v1478, %v1470
    %v2343 = vpack.c.b16 %v1479, %v1471
    %v2344 = vpack.c.b16 %v1480, %v1472
    %v2345 = vpack.c.b16 %v1489, %v1481
    %v2346 = vpack.c.b16 %v1490, %v1482
    %v2347 = vpack.c.b16 %v1491, %v1483
    %v2348 = vpack.c.b16 %v1492, %v1484
    %v2349 = vpack.c.b16 %v1493, %v1485
    %v2350 = vpack.c.b16 %v1494, %v1486
    %v2351 = vpack.c.b16 %v1495, %v1487
    %v2352 = vpack.c.b16 %v1496, %v1488
    %v2353 = vpack.c.b16 %v1505, %v1497
    %v2354 = vpack.c.b16 %v1506, %v1498
    %v2355 = vpack.c.b16 %v1507, %v1499
    %v2356 = vpack.c.b16 %v1508, %v1500
    %v2357 = vpack.c.b16 %v1509, %v1501
    %v2358 = vpack.c.b16 %v1510, %v1502
    %v2359 = vpack.c.b16 %v1511, %v1503
    %v2360 = vpack.c.b16 %v1512, %v1504
    %v2361 = vpack.c.b16 %v1521, %v1513
    %v2362 = vpack.c.b16 %v1522, %v1514
    %v2363 = vpack.c.b16 %v1523, %v1515
    %v2364 = vpack.c.b16 %v1524, %v1516
    %v2365 = vpack.c.b16 %v1525, %v1517
    %v2366 = vpack.c.b16 %v1526, %v1518
    %v2367 = vpack.c.b16 %v1527, %v1519
    %v2368 = vpack.c.b16 %v1528, %v1520
    %v2369 = vpack.c.b16 %v1537, %v1529
    %v2370 = vpack.c.b16 %v1538, %v1530
    %v2371 = vpack.c.b16 %v1539, %v1531
    %v2372 = vpack.c.b16 %v1540, %v1532
    %v2373 = vpack.c.b16 %v1541, %v1533
    %v2374 = vpack.c.b16 %v1542, %v1534
    %v2375 = vpack.c.b16 %v1543, %v1535
    %v2376 = vpack.c.b16 %v1544, %v1536
    %v2377 = vpack.c.b16 %v1553, %v1545
    %v2378 = vpack.c.b16 %v1554, %v1546
    %v2379 = vpack.c.b16 %v1555, %v1547
    %v2380 = vpack.c.b16 %v1556, %v1548
    %v2381 = vpack.c.b16 %v1557, %v1549
    %v2382 = vpack.c.b16 %v1558, %v1550
    %v2383 = vpack.c.b16 %v1559, %v1551
    %v2384 = vpack.c.b16 %v1560, %v1552
    %v2385 = vpack.c.b16 %v1569, %v1561
    %v2386 = vpack.c.b16 %v1570, %v1562
    %v2387 = vpack.c.b16 %v1571, %v1563
    %v2388 = vpack.c.b16 %v1572, %v1564
    %v2389 = vpack.c.b16 %v1573, %v1565
    %v2390 = vpack.c.b16 %v1574, %v1566
    %v2391 = vpack.c.b16 %v1575, %v1567
    %v2392 = vpack.c.b16 %v1576, %v1568
    %v2393 = vpack.c.b16 %v1585, %v1577
    %v2394 = vpack.c.b16 %v1586, %v1578
    %v2395 = vpack.c.b16 %v1587, %v1579
    %v2396 = vpack.c.b16 %v1588, %v1580
    %v2397 = vpack.c.b16 %v1589, %v1581
    %v2398 = vpack.c.b16 %v1590, %v1582
    %v2399 = vpack.c.b16 %v1591, %v1583
    %v2400 = vpack.c.b16 %v1592, %v1584
    %v2401 = vpack.c.b16 %v1601, %v1593
    %v2402 = vpack.c.b16 %v1602, %v1594
    %v2403 = vpack.c.b16 %v1603, %v1595
    %v2404 = vpack.c.b16 %v1604, %v1596
    %v2405 = vpack.c.b16 %v1605, %v1597
    %v2406 = vpack.c.b16 %v1606, %v1598
    %v2407 = vpack.c.b16 %v1607, %v1599
    %v2408 = vpack.c.b16 %v1608, %v1600
    %v2409 = vpack.c.b16 %v1617, %v1609
    %v2410 = vpack.c.b16 %v1618, %v1610
    %v2411 = vpack.c.b16 %v1619, %v1611
    %v2412 = vpack.c.b16 %v1620, %v1612
    %v2413 = vpack.c.b16 %v1621, %v1613
    %v2414 = vpack.c.b16 %v1622, %v1614
    %v2415 = vpack.c.b16 %v1623, %v1615
    %v2416 = vpack.c.b16 %v1624, %v1616
    %v2417 = vpack.c.b16 %v1633, %v1625
    %v2418 = vpack.c.b16 %v1634, %v1626
    %v2419 = vpack.c.b16 %v1635, %v1627
    %v2420 = vpack.c.b16 %v1636, %v1628
    %v2421 = vpack.c.b16 %v1637, %v1629
    %v2422 = vpack.c.b16 %v1638, %v1630
    %v2423 = vpack.c.b16 %v1639, %v1631
    %v2424 = vpack.c.b16 %v1640, %v1632
    %v2425 = vpack.c.b16 %v1649, %v1641
    %v2426 = vpack.c.b16 %v1650, %v1642
    %v2427 = vpack.c.b16 %v1651, %v1643
    %v2428 = vpack.c.b16 %v1652, %v1644
    %v2429 = vpack.c.b16 %v1653, %v1645
    %v2430 = vpack.c.b16 %v1654, %v1646
    %v2431 = vpack.c.b16 %v1655, %v1647
    %v2432 = vpack.c.b16 %v1656, %v1648
    %v2433 = vpack.c.b16 %v1665, %v1657
    %v2434 = vpack.c.b16 %v1666, %v1658
    %v2435 = vpack.c.b16 %v1667, %v1659
    %v2436 = vpack.c.b16 %v1668, %v1660
    %v2437 = vpack.c.b16 %v1669, %v1661
    %v2438 = vpack.c.b16 %v1670, %v1662
    %v2439 = vpack.c.b16 %v1671, %v1663
    %v2440 = vpack.c.b16 %v1672, %v1664
    %v2441 = vpack.c.b16 %v1681, %v1673
    %v2442 = vpack.c.b16 %v1682, %v1674
    %v2443 = vpack.c.b16 %v1683, %v1675
    %v2444 = vpack.c.b16 %v1684, %v1676
    %v2445 = vpack.c.b16 %v1685, %v1677
    %v2446 = vpack.c.b16 %v1686, %v1678
    %v2447 = vpack.c.b16 %v1687, %v1679
    %v2448 = vpack.c.b16 %v1688, %v1680
    %v2449 = vpack.c.b16 %v1697, %v1689
    %v2450 = vpack.c.b16 %v1698, %v1690
    %v2451 = vpack.c.b16 %v1699, %v1691
    %v2452 = vpack.c.b16 %v1700, %v1692
    %v2453 = vpack.c.b16 %v1701, %v1693
    %v2454 = vpack.c.b16 %v1702, %v1694
    %v2455 = vpack.c.b16 %v1703, %v1695
    %v2456 = vpack.c.b16 %v1704, %v1696
    %v2457 = vpack.c.b16 %v1713, %v1705
    %v2458 = vpack.c.b16 %v1714, %v1706
    %v2459 = vpack.c.b16 %v1715, %v1707
    %v2460 = vpack.c.b16 %v1716, %v1708
    %v2461 = vpack.c.b16 %v1717, %v1709
    %v2462 = vpack.c.b16 %v1718, %v1710
    %v2463 = vpack.c.b16 %v1719, %v1711
    %v2464 = vpack.c.b16 %v1720, %v1712
    %v2465 = vpack.c.b16 %v1729, %v1721
    %v2466 = vpack.c.b16 %v1730, %v1722
    %v2467 = vpack.c.b16 %v1731, %v1723
    %v2468 = vpack.c.b16 %v1732, %v1724
    %v2469 = vpack.c.b16 %v1733, %v1725
    %v2470 = vpack.c.b16 %v1734, %v1726
    %v2471 = vpack.c.b16 %v1735, %v1727
    %v2472 = vpack.c.b16 %v1736, %v1728
    %v2473 = vpack.c.b16 %v1745, %v1737
    %v2474 = vpack.c.b16 %v1746, %v1738
    %v2475 = vpack.c.b16 %v1747, %v1739
    %v2476 = vpack.c.b16 %v1748, %v1740
    %v2477 = vpack.c.b16 %v1749, %v1741
    %v2478 = vpack.c.b16 %v1750, %v1742
    %v2479 = vpack.c.b16 %v1751, %v1743
    %v2480 = vpack.c.b16 %v1752, %v1744
    %v2481 = vpack.c.b16 %v1761, %v1753
    %v2482 = vpack.c.b16 %v1762, %v1754
    %v2483 = vpack.c.b16 %v1763, %v1755
    %v2484 = vpack.c.b16 %v1764, %v1756
    %v2485 = vpack.c.b16 %v1765, %v1757
    %v2486 = vpack.c.b16 %v1766, %v1758
    %v2487 = vpack.c.b16 %v1767, %v1759
    %v2488 = vpack.c.b16 %v1768, %v1760
    %v2489 = vpack.c.b16 %v1777, %v1769
    %v2490 = vpack.c.b16 %v1778, %v1770
    %v2491 = vpack.c.b16 %v1779, %v1771
    %v2492 = vpack.c.b16 %v1780, %v1772
    %v2493 = vpack.c.b16 %v1781, %v1773
    %v2494 = vpack.c.b16 %v1782, %v1774
    %v2495 = vpack.c.b16 %v1783, %v1775
    %v2496 = vpack.c.b16 %v1784, %v1776
    %v2497 = vpack.c.b16 %v1793, %v1785
    %v2498 = vpack.c.b16 %v1794, %v1786
    %v2499 = vpack.c.b16 %v1795, %v1787
    %v2500 = vpack.c.b16 %v1796, %v1788
    %v2501 = vpack.c.b16 %v1797, %v1789
    %v2502 = vpack.c.b16 %v1798, %v1790
    %v2503 = vpack.c.b16 %v1799, %v1791
    %v2504 = vpack.c.b16 %v1800, %v1792
    %v2505 = vpack.c.b16 %v1809, %v1801
    %v2506 = vpack.c.b16 %v1810, %v1802
    %v2507 = vpack.c.b16 %v1811, %v1803
    %v2508 = vpack.c.b16 %v1812, %v1804
    %v2509 = vpack.c.b16 %v1813, %v1805
    %v2510 = vpack.c.b16 %v1814, %v1806
    %v2511 = vpack.c.b16 %v1815, %v1807
    %v2512 = vpack.c.b16 %v1816, %v1808
    %v2513 = vpack.c.b16 %v1825, %v1817
    %v2514 = vpack.c.b16 %v1826, %v1818
    %v2515 = vpack.c.b16 %v1827, %v1819
    %v2516 = vpack.c.b16 %v1828, %v1820
    %v2517 = vpack.c.b16 %v1829, %v1821
    %v2518 = vpack.c.b16 %v1830, %v1822
    %v2519 = vpack.c.b16 %v1831, %v1823
    %v2520 = vpack.c.b16 %v1832, %v1824
    %v2521 = vpack.c.b16 %v1841, %v1833
    %v2522 = vpack.c.b16 %v1842, %v1834
    %v2523 = vpack.c.b16 %v1843, %v1835
    %v2524 = vpack.c.b16 %v1844, %v1836
    %v2525 = vpack.c.b16 %v1845, %v1837
    %v2526 = vpack.c.b16 %v1846, %v1838
    %v2527 = vpack.c.b16 %v1847, %v1839
    %v2528 = vpack.c.b16 %v1848, %v1840
    %v2529 = vpack.c.b16 %v1857, %v1849
    %v2530 = vpack.c.b16 %v1858, %v1850
    %v2531 = vpack.c.b16 %v1859, %v1851
    %v2532 = vpack.c.b16 %v1860, %v1852
    %v2533 = vpack.c.b16 %v1861, %v1853
    %v2534 = vpack.c.b16 %v1862, %v1854
    %v2535 = vpack.c.b16 %v1863, %v1855
    %v2536 = vpack.c.b16 %v1864, %v1856
    %v2537 = vpack.c.b16 %v1873, %v1865
    %v2538 = vpack.c.b16 %v1874, %v1866
    %v2539 = vpack.c.b16 %v1875, %v1867
    %v2540 = vpack.c.b16 %v1876, %v1868
    %v2541 = vpack.c.b16 %v1877, %v1869
    %v2542 = vpack.c.b16 %v1878, %v1870
    %v2543 = vpack.c.b16 %v1879, %v1871
    %v2544 = vpack.c.b16 %v1880, %v1872
    %v2545 = vpack.c.b16 %v1889, %v1881
    %v2546 = vpack.c.b16 %v1890, %v1882
    %v2547 = vpack.c.b16 %v1891, %v1883
    %v2548 = vpack.c.b16 %v1892, %v1884
    %v2549 = vpack.c.b16 %v1893, %v1885
    %v2550 = vpack.c.b16 %v1894, %v1886
    %v2551 = vpack.c.b16 %v1895, %v1887
    %v2552 = vpack.c.b16 %v1896, %v1888
    %v2553 = vpack.c.b16 %v1905, %v1897
    %v2554 = vpack.c.b16 %v1906, %v1898
    %v2555 = vpack.c.b16 %v1907, %v1899
    %v2556 = vpack.c.b16 %v1908, %v1900
    %v2557 = vpack.c.b16 %v1909, %v1901
    %v2558 = vpack.c.b16 %v1910, %v1902
    %v2559 = vpack.c.b16 %v1911, %v1903
    %v2560 = vpack.c.b16 %v1912, %v1904
    %v2561 = vpack.c.b16 %v1921, %v1913
    %v2562 = vpack.c.b16 %v1922, %v1914
    %v2563 = vpack.c.b16 %v1923, %v1915
    %v2564 = vpack.c.b16 %v1924, %v1916
    %v2565 = vpack.c.b16 %v1925, %v1917
    %v2566 = vpack.c.b16 %v1926, %v1918
    %v2567 = vpack.c.b16 %v1927, %v1919
    %v2568 = vpack.c.b16 %v1928, %v1920
    %v2569 = vpack.c.b16 %v1937, %v1929
    %v2570 = vpack.c.b16 %v1938, %v1930
    %v2571 = vpack.c.b16 %v1939, %v1931
    %v2572 = vpack.c.b16 %v1940, %v1932
    %v2573 = vpack.c.b16 %v1941, %v1933
    %v2574 = vpack.c.b16 %v1942, %v1934
    %v2575 = vpack.c.b16 %v1943, %v1935
    %v2576 = vpack.c.b16 %v1944, %v1936
    %v2577 = vpack.c.b16 %v1953, %v1945
    %v2578 = vpack.c.b16 %v1954, %v1946
    %v2579 = vpack.c.b16 %v1955, %v1947
    %v2580 = vpack.c.b16 %v1956, %v1948
    %v2581 = vpack.c.b16 %v1957, %v1949
    %v2582 = vpack.c.b16 %v1958, %v1950
    %v2583 = vpack.c.b16 %v1959, %v1951
    %v2584 = vpack.c.b16 %v1960, %v1952
    %v2585 = vpack.c.b16 %v1969, %v1961
    %v2586 = vpack.c.b16 %v1970, %v1962
    %v2587 = vpack.c.b16 %v1971, %v1963
    %v2588 = vpack.c.b16 %v1972, %v1964
    %v2589 = vpack.c.b16 %v1973, %v1965
    %v2590 = vpack.c.b16 %v1974, %v1966
    %v2591 = vpack.c.b16 %v1975, %v1967
    %v2592 = vpack.c.b16 %v1976, %v1968
    %v2593 = vpack.c.b16 %v1985, %v1977
    %v2594 = vpack.c.b16 %v1986, %v1978
    %v2595 = vpack.c.b16 %v1987, %v1979
    %v2596 = vpack.c.b16 %v1988, %v1980
    %v2597 = vpack.c.b16 %v1989, %v1981
    %v2598 = vpack.c.b16 %v1990, %v1982
    %v2599 = vpack.c.b16 %v1991, %v1983
    %v2600 = vpack.c.b16 %v1992, %v1984
    %v2601 = vpack.c.b16 %v2001, %v1993
    %v2602 = vpack.c.b16 %v2002, %v1994
    %v2603 = vpack.c.b16 %v2003, %v1995
    %v2604 = vpack.c.b16 %v2004, %v1996
    %v2605 = vpack.c.b16 %v2005, %v1997
    %v2606 = vpack.c.b16 %v2006, %v1998
    %v2607 = vpack.c.b16 %v2007, %v1999
    %v2608 = vpack.c.b16 %v2008, %v2000
    %v2609 = vpack.c.b16 %v2017, %v2009
    %v2610 = vpack.c.b16 %v2018, %v2010
    %v2611 = vpack.c.b16 %v2019, %v2011
    %v2612 = vpack.c.b16 %v2020, %v2012
    %v2613 = vpack.c.b16 %v2021, %v2013
    %v2614 = vpack.c.b16 %v2022, %v2014
    %v2615 = vpack.c.b16 %v2023, %v2015
    %v2616 = vpack.c.b16 %v2024, %v2016
    %v2617 = vpack.c.b16 %v2033, %v2025
    %v2618 = vpack.c.b16 %v2034, %v2026
    %v2619 = vpack.c.b16 %v2035, %v2027
    %v2620 = vpack.c.b16 %v2036, %v2028
    %v2621 = vpack.c.b16 %v2037, %v2029
    %v2622 = vpack.c.b16 %v2038, %v2030
    %v2623 = vpack.c.b16 %v2039, %v2031
    %v2624 = vpack.c.b16 %v2040, %v2032
    %v2625 = vpack.c.b16 %v2049, %v2041
    %v2626 = vpack.c.b16 %v2050, %v2042
    %v2627 = vpack.c.b16 %v2051, %v2043
    %v2628 = vpack.c.b16 %v2052, %v2044
    %v2629 = vpack.c.b16 %v2053, %v2045
    %v2630 = vpack.c.b16 %v2054, %v2046
    %v2631 = vpack.c.b16 %v2055, %v2047
    %v2632 = vpack.c.b16 %v2056, %v2048
    %v2633 = vpack.c.b16 %v2065, %v2057
    %v2634 = vpack.c.b16 %v2066, %v2058
    %v2635 = vpack.c.b16 %v2067, %v2059
    %v2636 = vpack.c.b16 %v2068, %v2060
    %v2637 = vpack.c.b16 %v2069, %v2061
    %v2638 = vpack.c.b16 %v2070, %v2062
    %v2639 = vpack.c.b16 %v2071, %v2063
    %v2640 = vpack.c.b16 %v2072, %v2064
    %v2641 = vpack.c.b16 %v2081, %v2073
    %v2642 = vpack.c.b16 %v2082, %v2074
    %v2643 = vpack.c.b16 %v2083, %v2075
    %v2644 = vpack.c.b16 %v2084, %v2076
    %v2645 = vpack.c.b16 %v2085, %v2077
    %v2646 = vpack.c.b16 %v2086, %v2078
    %v2647 = vpack.c.b16 %v2087, %v2079
    %v2648 = vpack.c.b16 %v2088, %v2080
    %v2649 = vpack.c.b16 %v2097, %v2089
    %v2650 = vpack.c.b16 %v2098, %v2090
    %v2651 = vpack.c.b16 %v2099, %v2091
    %v2652 = vpack.c.b16 %v2100, %v2092
    %v2653 = vpack.c.b16 %v2101, %v2093
    %v2654 = vpack.c.b16 %v2102, %v2094
    %v2655 = vpack.c.b16 %v2103, %v2095
    %v2656 = vpack.c.b16 %v2104, %v2096
    %v2657 = vpack.c.b16 %v2113, %v2105
    %v2658 = vpack.c.b16 %v2114, %v2106
    %v2659 = vpack.c.b16 %v2115, %v2107
    %v2660 = vpack.c.b16 %v2116, %v2108
    %v2661 = vpack.c.b16 %v2117, %v2109
    %v2662 = vpack.c.b16 %v2118, %v2110
    %v2663 = vpack.c.b16 %v2119, %v2111
    %v2664 = vpack.c.b16 %v2120, %v2112
    %v2665 = vpack.c.b16 %v2129, %v2121
    %v2666 = vpack.c.b16 %v2130, %v2122
    %v2667 = vpack.c.b16 %v2131, %v2123
    %v2668 = vpack.c.b16 %v2132, %v2124
    %v2669 = vpack.c.b16 %v2133, %v2125
    %v2670 = vpack.c.b16 %v2134, %v2126
    %v2671 = vpack.c.b16 %v2135, %v2127
    %v2672 = vpack.c.b16 %v2136, %v2128
    %v2673 = vpack.c.b16 %v2145, %v2137
    %v2674 = vpack.c.b16 %v2146, %v2138
    %v2675 = vpack.c.b16 %v2147, %v2139
    %v2676 = vpack.c.b16 %v2148, %v2140
    %v2677 = vpack.c.b16 %v2149, %v2141
    %v2678 = vpack.c.b16 %v2150, %v2142
    %v2679 = vpack.c.b16 %v2151, %v2143
    %v2680 = vpack.c.b16 %v2152, %v2144
    %v2681 = vpack.c.b16 %v2161, %v2153
    %v2682 = vpack.c.b16 %v2162, %v2154
    %v2683 = vpack.c.b16 %v2163, %v2155
    %v2684 = vpack.c.b16 %v2164, %v2156
    %v2685 = vpack.c.b16 %v2165, %v2157
    %v2686 = vpack.c.b16 %v2166, %v2158
    %v2687 = vpack.c.b16 %v2167, %v2159
    %v2688 = vpack.c.b16 %v2168, %v2160
    %v2689 = vpack.c.b16 %v2177, %v2169
    %v2690 = vpack.c.b16 %v2178, %v2170
    %v2691 = vpack.c.b16 %v2179, %v2171
    %v2692 = vpack.c.b16 %v2180, %v2172
    %v2693 = vpack.c.b16 %v2181, %v2173
    %v2694 = vpack.c.b16 %v2182, %v2174
    %v2695 = vpack.c.b16 %v2183, %v2175
    %v2696 = vpack.c.b16 %v2184, %v2176
    %3209 = vmatprep.subr.bf16.mxu0 %v2242
    %3210 = vmatpush1.bf16.msra.mxu0 %v2241
    %3211 = vmatprep.subr.bf16.mxu0 %v2234
    %3212 = vmatpush1.bf16.msra.mxu0 %v2233
    %3213 = vmatprep.subr.bf16.mxu0 %v2226
    %3214 = vmatpush1.bf16.msra.mxu0 %v2225
    %3215 = vmatprep.subr.bf16.mxu0 %v2218
    %3216 = vmatpush1.bf16.msra.mxu0 %v2217
    %3217 = vmatprep.subr.bf16.mxu0 %v2210
    %3218 = vmatpush1.bf16.msra.mxu0 %v2209
    %3219 = vmatprep.subr.bf16.mxu0 %v2202
    %3220 = vmatpush1.bf16.msra.mxu0 %v2201
    %3221 = vmatprep.subr.bf16.mxu0 %v2194
    %3222 = vmatpush1.bf16.msra.mxu0 %v2193
    %3223 = vmatprep.subr.bf16.mxu0 %v2186
    %3224 = vmatpush1.bf16.msra.mxu0 %v2185
    %3225 = vmatprep.subr.bf16.mxu0 %v2306
    %3226 = vmatpush2.bf16.msra.mxu0 %v2305
    %3227 = vmatprep.subr.bf16.mxu0 %v2298
    %3228 = vmatpush2.bf16.msra.mxu0 %v2297
    %3229 = vmatprep.subr.bf16.mxu0 %v2290
    %3230 = vmatpush2.bf16.msra.mxu0 %v2289
    %3231 = vmatprep.subr.bf16.mxu0 %v2282
    %3232 = vmatpush2.bf16.msra.mxu0 %v2281
    %3233 = vmatprep.subr.bf16.mxu0 %v2274
    %3234 = vmatpush2.bf16.msra.mxu0 %v2273
    %3235 = vmatprep.subr.bf16.mxu0 %v2266
    %3236 = vmatpush2.bf16.msra.mxu0 %v2265
    %3237 = vmatprep.subr.bf16.mxu0 %v2258
    %3238 = vmatpush2.bf16.msra.mxu0 %v2257
    %3239 = vmatprep.subr.bf16.mxu0 %v2250
    %3240 = vmatpush2.bf16.msra.mxu0 %v2249
    %3241 = vmatprep.mubr.bf16.mxu0 %v88
    %3242 = vmatmul.mubr.bf16.gmra.mxu0 %v87
    %v3243 = vpop.f32.mrf.mxu0
    %v3244 = vadd.f32 %v612, %v3243
    %v3245 = vpop.f32.mrf.mxu0
    %v3246 = vadd.f32 %v616, %v3245
    %v3247 = vpop.f32.mrf.mxu0
    %v3248 = vpop.f32.mrf.mxu0
    %3249 = vdwg.mxu0
    %3250 = vmatprep.subr.bf16.mxu0 %v2370
    %3251 = vmatpush1.bf16.msra.mxu0 %v2369
    %3252 = vmatprep.subr.bf16.mxu0 %v2362
    %3253 = vmatpush1.bf16.msra.mxu0 %v2361
    %3254 = vmatprep.subr.bf16.mxu0 %v2354
    %3255 = vmatpush1.bf16.msra.mxu0 %v2353
    %3256 = vmatprep.subr.bf16.mxu0 %v2346
    %3257 = vmatpush1.bf16.msra.mxu0 %v2345
    %3258 = vmatprep.subr.bf16.mxu0 %v2338
    %3259 = vmatpush1.bf16.msra.mxu0 %v2337
    %3260 = vmatprep.subr.bf16.mxu0 %v2330
    %3261 = vmatpush1.bf16.msra.mxu0 %v2329
    %3262 = vmatprep.subr.bf16.mxu0 %v2322
    %3263 = vmatpush1.bf16.msra.mxu0 %v2321
    %3264 = vmatprep.subr.bf16.mxu0 %v2314
    %3265 = vmatpush1.bf16.msra.mxu0 %v2313
    %3266 = vmatprep.subr.bf16.mxu0 %v2434
    %3267 = vmatpush2.bf16.msra.mxu0 %v2433
    %3268 = vmatprep.subr.bf16.mxu0 %v2426
    %3269 = vmatpush2.bf16.msra.mxu0 %v2425
    %3270 = vmatprep.subr.bf16.mxu0 %v2418
    %3271 = vmatpush2.bf16.msra.mxu0 %v2417
    %3272 = vmatprep.subr.bf16.mxu0 %v2410
    %3273 = vmatpush2.bf16.msra.mxu0 %v2409
    %3274 = vmatprep.subr.bf16.mxu0 %v2402
    %3275 = vmatpush2.bf16.msra.mxu0 %v2401
    %3276 = vmatprep.subr.bf16.mxu0 %v2394
    %3277 = vmatpush2.bf16.msra.mxu0 %v2393
    %3278 = vmatprep.subr.bf16.mxu0 %v2386
    %3279 = vmatpush2.bf16.msra.mxu0 %v2385
    %3280 = vmatprep.subr.bf16.mxu0 %v2378
    %3281 = vmatpush2.bf16.msra.mxu0 %v2377
    %3282 = vmatprep.mubr.bf16.mxu0 %v90
    %3283 = vmatmul.mubr.bf16.gmra.mxu0 %v89
    %v3284 = vpop.f32.mrf.mxu0
    %v3285 = vadd.f32 %v3244, %v3284
    %v3286 = vpop.f32.mrf.mxu0
    %v3287 = vadd.f32 %v3246, %v3286
    %v3288 = vpop.f32.mrf.mxu0
    %v3289 = vpop.f32.mrf.mxu0
    %3290 = vdwg.mxu0
    %3291 = vmatprep.subr.bf16.mxu0 %v2498
    %3292 = vmatpush1.bf16.msra.mxu0 %v2497
    %3293 = vmatprep.subr.bf16.mxu0 %v2490
    %3294 = vmatpush1.bf16.msra.mxu0 %v2489
    %3295 = vmatprep.subr.bf16.mxu0 %v2482
    %3296 = vmatpush1.bf16.msra.mxu0 %v2481
    %3297 = vmatprep.subr.bf16.mxu0 %v2474
    %3298 = vmatpush1.bf16.msra.mxu0 %v2473
    %3299 = vmatprep.subr.bf16.mxu0 %v2466
    %3300 = vmatpush1.bf16.msra.mxu0 %v2465
    %3301 = vmatprep.subr.bf16.mxu0 %v2458
    %3302 = vmatpush1.bf16.msra.mxu0 %v2457
    %3303 = vmatprep.subr.bf16.mxu0 %v2450
    %3304 = vmatpush1.bf16.msra.mxu0 %v2449
    %3305 = vmatprep.subr.bf16.mxu0 %v2442
    %3306 = vmatpush1.bf16.msra.mxu0 %v2441
    %3307 = vmatprep.subr.bf16.mxu0 %v2562
    %3308 = vmatpush2.bf16.msra.mxu0 %v2561
    %3309 = vmatprep.subr.bf16.mxu0 %v2554
    %3310 = vmatpush2.bf16.msra.mxu0 %v2553
    %3311 = vmatprep.subr.bf16.mxu0 %v2546
    %3312 = vmatpush2.bf16.msra.mxu0 %v2545
    %3313 = vmatprep.subr.bf16.mxu0 %v2538
    %3314 = vmatpush2.bf16.msra.mxu0 %v2537
    %3315 = vmatprep.subr.bf16.mxu0 %v2530
    %3316 = vmatpush2.bf16.msra.mxu0 %v2529
    %3317 = vmatprep.subr.bf16.mxu0 %v2522
    %3318 = vmatpush2.bf16.msra.mxu0 %v2521
    %3319 = vmatprep.subr.bf16.mxu0 %v2514
    %3320 = vmatpush2.bf16.msra.mxu0 %v2513
    %3321 = vmatprep.subr.bf16.mxu0 %v2506
    %3322 = vmatpush2.bf16.msra.mxu0 %v2505
    %3323 = vmatprep.mubr.bf16.mxu0 %v92
    %3324 = vmatmul.mubr.bf16.gmra.mxu0 %v91
    %v3325 = vpop.f32.mrf.mxu0
    %v3326 = vadd.f32 %v3285, %v3325
    %v3327 = vpop.f32.mrf.mxu0
    %v3328 = vadd.f32 %v3287, %v3327
    %v3329 = vpop.f32.mrf.mxu0
    %v3330 = vpop.f32.mrf.mxu0
    %3331 = vdwg.mxu0
    %3332 = vmatprep.subr.bf16.mxu0 %v2626
    %3333 = vmatpush1.bf16.msra.mxu0 %v2625
    %3334 = vmatprep.subr.bf16.mxu0 %v2618
    %3335 = vmatpush1.bf16.msra.mxu0 %v2617
    %3336 = vmatprep.subr.bf16.mxu0 %v2610
    %3337 = vmatpush1.bf16.msra.mxu0 %v2609
    %3338 = vmatprep.subr.bf16.mxu0 %v2602
    %3339 = vmatpush1.bf16.msra.mxu0 %v2601
    %3340 = vmatprep.subr.bf16.mxu0 %v2594
    %3341 = vmatpush1.bf16.msra.mxu0 %v2593
    %3342 = vmatprep.subr.bf16.mxu0 %v2586
    %3343 = vmatpush1.bf16.msra.mxu0 %v2585
    %3344 = vmatprep.subr.bf16.mxu0 %v2578
    %3345 = vmatpush1.bf16.msra.mxu0 %v2577
    %3346 = vmatprep.subr.bf16.mxu0 %v2570
    %3347 = vmatpush1.bf16.msra.mxu0 %v2569
    %3348 = vmatprep.subr.bf16.mxu0 %v2690
    %3349 = vmatpush2.bf16.msra.mxu0 %v2689
    %3350 = vmatprep.subr.bf16.mxu0 %v2682
    %3351 = vmatpush2.bf16.msra.mxu0 %v2681
    %3352 = vmatprep.subr.bf16.mxu0 %v2674
    %3353 = vmatpush2.bf16.msra.mxu0 %v2673
    %3354 = vmatprep.subr.bf16.mxu0 %v2666
    %3355 = vmatpush2.bf16.msra.mxu0 %v2665
    %3356 = vmatprep.subr.bf16.mxu0 %v2658
    %3357 = vmatpush2.bf16.msra.mxu0 %v2657
    %3358 = vmatprep.subr.bf16.mxu0 %v2650
    %3359 = vmatpush2.bf16.msra.mxu0 %v2649
    %3360 = vmatprep.subr.bf16.mxu0 %v2642
    %3361 = vmatpush2.bf16.msra.mxu0 %v2641
    %3362 = vmatprep.subr.bf16.mxu0 %v2634
    %3363 = vmatpush2.bf16.msra.mxu0 %v2633
    %3364 = vmatprep.mubr.bf16.mxu0 %v94
    %3365 = vmatmul.mubr.bf16.gmra.mxu0 %v93
    %v3366 = vpop.f32.mrf.mxu0
    %v3367 = vadd.f32 %v3326, %v3366
    %v3368 = vpop.f32.mrf.mxu0
    %v3369 = vadd.f32 %v3328, %v3368
    %v3370 = vpop.f32.mrf.mxu0
    %v3371 = vpop.f32.mrf.mxu0
    %3372 = vdwg.mxu0
    %3373 = vmatprep.subr.bf16.mxu0 %v2244
    %3374 = vmatpush1.bf16.msra.mxu0 %v2243
    %3375 = vmatprep.subr.bf16.mxu0 %v2236
    %3376 = vmatpush1.bf16.msra.mxu0 %v2235
    %3377 = vmatprep.subr.bf16.mxu0 %v2228
    %3378 = vmatpush1.bf16.msra.mxu0 %v2227
    %3379 = vmatprep.subr.bf16.mxu0 %v2220
    %3380 = vmatpush1.bf16.msra.mxu0 %v2219
    %3381 = vmatprep.subr.bf16.mxu0 %v2212
    %3382 = vmatpush1.bf16.msra.mxu0 %v2211
    %3383 = vmatprep.subr.bf16.mxu0 %v2204
    %3384 = vmatpush1.bf16.msra.mxu0 %v2203
    %3385 = vmatprep.subr.bf16.mxu0 %v2196
    %3386 = vmatpush1.bf16.msra.mxu0 %v2195
    %3387 = vmatprep.subr.bf16.mxu0 %v2188
    %3388 = vmatpush1.bf16.msra.mxu0 %v2187
    %3389 = vmatprep.subr.bf16.mxu0 %v2308
    %3390 = vmatpush2.bf16.msra.mxu0 %v2307
    %3391 = vmatprep.subr.bf16.mxu0 %v2300
    %3392 = vmatpush2.bf16.msra.mxu0 %v2299
    %3393 = vmatprep.subr.bf16.mxu0 %v2292
    %3394 = vmatpush2.bf16.msra.mxu0 %v2291
    %3395 = vmatprep.subr.bf16.mxu0 %v2284
    %3396 = vmatpush2.bf16.msra.mxu0 %v2283
    %3397 = vmatprep.subr.bf16.mxu0 %v2276
    %3398 = vmatpush2.bf16.msra.mxu0 %v2275
    %3399 = vmatprep.subr.bf16.mxu0 %v2268
    %3400 = vmatpush2.bf16.msra.mxu0 %v2267
    %3401 = vmatprep.subr.bf16.mxu0 %v2260
    %3402 = vmatpush2.bf16.msra.mxu0 %v2259
    %3403 = vmatprep.subr.bf16.mxu0 %v2252
    %3404 = vmatpush2.bf16.msra.mxu0 %v2251
    %3405 = vmatprep.mubr.bf16.mxu0 %v88
    %3406 = vmatmul.mubr.bf16.gmra.mxu0 %v87
    %v3407 = vpop.f32.mrf.mxu0
    %v3408 = vadd.f32 %v620, %v3407
    %v3409 = vpop.f32.mrf.mxu0
    %v3410 = vadd.f32 %v624, %v3409
    %v3411 = vpop.f32.mrf.mxu0
    %v3412 = vpop.f32.mrf.mxu0
    %3413 = vdwg.mxu0
    %3414 = vmatprep.subr.bf16.mxu0 %v2372
    %3415 = vmatpush1.bf16.msra.mxu0 %v2371
    %3416 = vmatprep.subr.bf16.mxu0 %v2364
    %3417 = vmatpush1.bf16.msra.mxu0 %v2363
    %3418 = vmatprep.subr.bf16.mxu0 %v2356
    %3419 = vmatpush1.bf16.msra.mxu0 %v2355
    %3420 = vmatprep.subr.bf16.mxu0 %v2348
    %3421 = vmatpush1.bf16.msra.mxu0 %v2347
    %3422 = vmatprep.subr.bf16.mxu0 %v2340
    %3423 = vmatpush1.bf16.msra.mxu0 %v2339
    %3424 = vmatprep.subr.bf16.mxu0 %v2332
    %3425 = vmatpush1.bf16.msra.mxu0 %v2331
    %3426 = vmatprep.subr.bf16.mxu0 %v2324
    %3427 = vmatpush1.bf16.msra.mxu0 %v2323
    %3428 = vmatprep.subr.bf16.mxu0 %v2316
    %3429 = vmatpush1.bf16.msra.mxu0 %v2315
    %3430 = vmatprep.subr.bf16.mxu0 %v2436
    %3431 = vmatpush2.bf16.msra.mxu0 %v2435
    %3432 = vmatprep.subr.bf16.mxu0 %v2428
    %3433 = vmatpush2.bf16.msra.mxu0 %v2427
    %3434 = vmatprep.subr.bf16.mxu0 %v2420
    %3435 = vmatpush2.bf16.msra.mxu0 %v2419
    %3436 = vmatprep.subr.bf16.mxu0 %v2412
    %3437 = vmatpush2.bf16.msra.mxu0 %v2411
    %3438 = vmatprep.subr.bf16.mxu0 %v2404
    %3439 = vmatpush2.bf16.msra.mxu0 %v2403
    %3440 = vmatprep.subr.bf16.mxu0 %v2396
    %3441 = vmatpush2.bf16.msra.mxu0 %v2395
    %3442 = vmatprep.subr.bf16.mxu0 %v2388
    %3443 = vmatpush2.bf16.msra.mxu0 %v2387
    %3444 = vmatprep.subr.bf16.mxu0 %v2380
    %3445 = vmatpush2.bf16.msra.mxu0 %v2379
    %3446 = vmatprep.mubr.bf16.mxu0 %v90
    %3447 = vmatmul.mubr.bf16.gmra.mxu0 %v89
    %v3448 = vpop.f32.mrf.mxu0
    %v3449 = vadd.f32 %v3408, %v3448
    %v3450 = vpop.f32.mrf.mxu0
    %v3451 = vadd.f32 %v3410, %v3450
    %v3452 = vpop.f32.mrf.mxu0
    %v3453 = vpop.f32.mrf.mxu0
    %3454 = vdwg.mxu0
    %3455 = vmatprep.subr.bf16.mxu0 %v2500
    %3456 = vmatpush1.bf16.msra.mxu0 %v2499
    %3457 = vmatprep.subr.bf16.mxu0 %v2492
    %3458 = vmatpush1.bf16.msra.mxu0 %v2491
    %3459 = vmatprep.subr.bf16.mxu0 %v2484
    %3460 = vmatpush1.bf16.msra.mxu0 %v2483
    %3461 = vmatprep.subr.bf16.mxu0 %v2476
    %3462 = vmatpush1.bf16.msra.mxu0 %v2475
    %3463 = vmatprep.subr.bf16.mxu0 %v2468
    %3464 = vmatpush1.bf16.msra.mxu0 %v2467
    %3465 = vmatprep.subr.bf16.mxu0 %v2460
    %3466 = vmatpush1.bf16.msra.mxu0 %v2459
    %3467 = vmatprep.subr.bf16.mxu0 %v2452
    %3468 = vmatpush1.bf16.msra.mxu0 %v2451
    %3469 = vmatprep.subr.bf16.mxu0 %v2444
    %3470 = vmatpush1.bf16.msra.mxu0 %v2443
    %3471 = vmatprep.subr.bf16.mxu0 %v2564
    %3472 = vmatpush2.bf16.msra.mxu0 %v2563
    %3473 = vmatprep.subr.bf16.mxu0 %v2556
    %3474 = vmatpush2.bf16.msra.mxu0 %v2555
    %3475 = vmatprep.subr.bf16.mxu0 %v2548
    %3476 = vmatpush2.bf16.msra.mxu0 %v2547
    %3477 = vmatprep.subr.bf16.mxu0 %v2540
    %3478 = vmatpush2.bf16.msra.mxu0 %v2539
    %3479 = vmatprep.subr.bf16.mxu0 %v2532
    %3480 = vmatpush2.bf16.msra.mxu0 %v2531
    %3481 = vmatprep.subr.bf16.mxu0 %v2524
    %3482 = vmatpush2.bf16.msra.mxu0 %v2523
    %3483 = vmatprep.subr.bf16.mxu0 %v2516
    %3484 = vmatpush2.bf16.msra.mxu0 %v2515
    %3485 = vmatprep.subr.bf16.mxu0 %v2508
    %3486 = vmatpush2.bf16.msra.mxu0 %v2507
    %3487 = vmatprep.mubr.bf16.mxu0 %v92
    %3488 = vmatmul.mubr.bf16.gmra.mxu0 %v91
    %v3489 = vpop.f32.mrf.mxu0
    %v3490 = vadd.f32 %v3449, %v3489
    %v3491 = vpop.f32.mrf.mxu0
    %v3492 = vadd.f32 %v3451, %v3491
    %v3493 = vpop.f32.mrf.mxu0
    %v3494 = vpop.f32.mrf.mxu0
    %3495 = vdwg.mxu0
    %3496 = vmatprep.subr.bf16.mxu0 %v2628
    %3497 = vmatpush1.bf16.msra.mxu0 %v2627
    %3498 = vmatprep.subr.bf16.mxu0 %v2620
    %3499 = vmatpush1.bf16.msra.mxu0 %v2619
    %3500 = vmatprep.subr.bf16.mxu0 %v2612
    %3501 = vmatpush1.bf16.msra.mxu0 %v2611
    %3502 = vmatprep.subr.bf16.mxu0 %v2604
    %3503 = vmatpush1.bf16.msra.mxu0 %v2603
    %3504 = vmatprep.subr.bf16.mxu0 %v2596
    %3505 = vmatpush1.bf16.msra.mxu0 %v2595
    %3506 = vmatprep.subr.bf16.mxu0 %v2588
    %3507 = vmatpush1.bf16.msra.mxu0 %v2587
    %3508 = vmatprep.subr.bf16.mxu0 %v2580
    %3509 = vmatpush1.bf16.msra.mxu0 %v2579
    %3510 = vmatprep.subr.bf16.mxu0 %v2572
    %3511 = vmatpush1.bf16.msra.mxu0 %v2571
    %3512 = vmatprep.subr.bf16.mxu0 %v2692
    %3513 = vmatpush2.bf16.msra.mxu0 %v2691
    %3514 = vmatprep.subr.bf16.mxu0 %v2684
    %3515 = vmatpush2.bf16.msra.mxu0 %v2683
    %3516 = vmatprep.subr.bf16.mxu0 %v2676
    %3517 = vmatpush2.bf16.msra.mxu0 %v2675
    %3518 = vmatprep.subr.bf16.mxu0 %v2668
    %3519 = vmatpush2.bf16.msra.mxu0 %v2667
    %3520 = vmatprep.subr.bf16.mxu0 %v2660
    %3521 = vmatpush2.bf16.msra.mxu0 %v2659
    %3522 = vmatprep.subr.bf16.mxu0 %v2652
    %3523 = vmatpush2.bf16.msra.mxu0 %v2651
    %3524 = vmatprep.subr.bf16.mxu0 %v2644
    %3525 = vmatpush2.bf16.msra.mxu0 %v2643
    %3526 = vmatprep.subr.bf16.mxu0 %v2636
    %3527 = vmatpush2.bf16.msra.mxu0 %v2635
    %3528 = vmatprep.mubr.bf16.mxu0 %v94
    %3529 = vmatmul.mubr.bf16.gmra.mxu0 %v93
    %v3530 = vpop.f32.mrf.mxu0
    %v3531 = vadd.f32 %v3490, %v3530
    %v3532 = vpop.f32.mrf.mxu0
    %v3533 = vadd.f32 %v3492, %v3532
    %v3534 = vpop.f32.mrf.mxu0
    %v3535 = vpop.f32.mrf.mxu0
    %3536 = vdwg.mxu0
    %3537 = vmatprep.subr.bf16.mxu0 %v2246
    %3538 = vmatpush1.bf16.msra.mxu0 %v2245
    %3539 = vmatprep.subr.bf16.mxu0 %v2238
    %3540 = vmatpush1.bf16.msra.mxu0 %v2237
    %3541 = vmatprep.subr.bf16.mxu0 %v2230
    %3542 = vmatpush1.bf16.msra.mxu0 %v2229
    %3543 = vmatprep.subr.bf16.mxu0 %v2222
    %3544 = vmatpush1.bf16.msra.mxu0 %v2221
    %3545 = vmatprep.subr.bf16.mxu0 %v2214
    %3546 = vmatpush1.bf16.msra.mxu0 %v2213
    %3547 = vmatprep.subr.bf16.mxu0 %v2206
    %3548 = vmatpush1.bf16.msra.mxu0 %v2205
    %3549 = vmatprep.subr.bf16.mxu0 %v2198
    %3550 = vmatpush1.bf16.msra.mxu0 %v2197
    %3551 = vmatprep.subr.bf16.mxu0 %v2190
    %3552 = vmatpush1.bf16.msra.mxu0 %v2189
    %3553 = vmatprep.subr.bf16.mxu0 %v2310
    %3554 = vmatpush2.bf16.msra.mxu0 %v2309
    %3555 = vmatprep.subr.bf16.mxu0 %v2302
    %3556 = vmatpush2.bf16.msra.mxu0 %v2301
    %3557 = vmatprep.subr.bf16.mxu0 %v2294
    %3558 = vmatpush2.bf16.msra.mxu0 %v2293
    %3559 = vmatprep.subr.bf16.mxu0 %v2286
    %3560 = vmatpush2.bf16.msra.mxu0 %v2285
    %3561 = vmatprep.subr.bf16.mxu0 %v2278
    %3562 = vmatpush2.bf16.msra.mxu0 %v2277
    %3563 = vmatprep.subr.bf16.mxu0 %v2270
    %3564 = vmatpush2.bf16.msra.mxu0 %v2269
    %3565 = vmatprep.subr.bf16.mxu0 %v2262
    %3566 = vmatpush2.bf16.msra.mxu0 %v2261
    %3567 = vmatprep.subr.bf16.mxu0 %v2254
    %3568 = vmatpush2.bf16.msra.mxu0 %v2253
    %3569 = vmatprep.mubr.bf16.mxu0 %v88
    %3570 = vmatmul.mubr.bf16.gmra.mxu0 %v87
    %v3571 = vpop.f32.mrf.mxu0
    %v3572 = vadd.f32 %v628, %v3571
    %v3573 = vpop.f32.mrf.mxu0
    %v3574 = vadd.f32 %v632, %v3573
    %v3575 = vpop.f32.mrf.mxu0
    %v3576 = vpop.f32.mrf.mxu0
    %3577 = vdwg.mxu0
    %3578 = vmatprep.subr.bf16.mxu0 %v2374
    %3579 = vmatpush1.bf16.msra.mxu0 %v2373
    %3580 = vmatprep.subr.bf16.mxu0 %v2366
    %3581 = vmatpush1.bf16.msra.mxu0 %v2365
    %3582 = vmatprep.subr.bf16.mxu0 %v2358
    %3583 = vmatpush1.bf16.msra.mxu0 %v2357
    %3584 = vmatprep.subr.bf16.mxu0 %v2350
    %3585 = vmatpush1.bf16.msra.mxu0 %v2349
    %3586 = vmatprep.subr.bf16.mxu0 %v2342
    %3587 = vmatpush1.bf16.msra.mxu0 %v2341
    %3588 = vmatprep.subr.bf16.mxu0 %v2334
    %3589 = vmatpush1.bf16.msra.mxu0 %v2333
    %3590 = vmatprep.subr.bf16.mxu0 %v2326
    %3591 = vmatpush1.bf16.msra.mxu0 %v2325
    %3592 = vmatprep.subr.bf16.mxu0 %v2318
    %3593 = vmatpush1.bf16.msra.mxu0 %v2317
    %3594 = vmatprep.subr.bf16.mxu0 %v2438
    %3595 = vmatpush2.bf16.msra.mxu0 %v2437
    %3596 = vmatprep.subr.bf16.mxu0 %v2430
    %3597 = vmatpush2.bf16.msra.mxu0 %v2429
    %3598 = vmatprep.subr.bf16.mxu0 %v2422
    %3599 = vmatpush2.bf16.msra.mxu0 %v2421
    %3600 = vmatprep.subr.bf16.mxu0 %v2414
    %3601 = vmatpush2.bf16.msra.mxu0 %v2413
    %3602 = vmatprep.subr.bf16.mxu0 %v2406
    %3603 = vmatpush2.bf16.msra.mxu0 %v2405
    %3604 = vmatprep.subr.bf16.mxu0 %v2398
    %3605 = vmatpush2.bf16.msra.mxu0 %v2397
    %3606 = vmatprep.subr.bf16.mxu0 %v2390
    %3607 = vmatpush2.bf16.msra.mxu0 %v2389
    %3608 = vmatprep.subr.bf16.mxu0 %v2382
    %3609 = vmatpush2.bf16.msra.mxu0 %v2381
    %3610 = vmatprep.mubr.bf16.mxu0 %v90
    %3611 = vmatmul.mubr.bf16.gmra.mxu0 %v89
    %v3612 = vpop.f32.mrf.mxu0
    %v3613 = vadd.f32 %v3572, %v3612
    %v3614 = vpop.f32.mrf.mxu0
    %v3615 = vadd.f32 %v3574, %v3614
    %v3616 = vpop.f32.mrf.mxu0
    %v3617 = vpop.f32.mrf.mxu0
    %3618 = vdwg.mxu0
    %3619 = vmatprep.subr.bf16.mxu0 %v2502
    %3620 = vmatpush1.bf16.msra.mxu0 %v2501
    %3621 = vmatprep.subr.bf16.mxu0 %v2494
    %3622 = vmatpush1.bf16.msra.mxu0 %v2493
    %3623 = vmatprep.subr.bf16.mxu0 %v2486
    %3624 = vmatpush1.bf16.msra.mxu0 %v2485
    %3625 = vmatprep.subr.bf16.mxu0 %v2478
    %3626 = vmatpush1.bf16.msra.mxu0 %v2477
    %3627 = vmatprep.subr.bf16.mxu0 %v2470
    %3628 = vmatpush1.bf16.msra.mxu0 %v2469
    %3629 = vmatprep.subr.bf16.mxu0 %v2462
    %3630 = vmatpush1.bf16.msra.mxu0 %v2461
    %3631 = vmatprep.subr.bf16.mxu0 %v2454
    %3632 = vmatpush1.bf16.msra.mxu0 %v2453
    %3633 = vmatprep.subr.bf16.mxu0 %v2446
    %3634 = vmatpush1.bf16.msra.mxu0 %v2445
    %3635 = vmatprep.subr.bf16.mxu0 %v2566
    %3636 = vmatpush2.bf16.msra.mxu0 %v2565
    %3637 = vmatprep.subr.bf16.mxu0 %v2558
    %3638 = vmatpush2.bf16.msra.mxu0 %v2557
    %3639 = vmatprep.subr.bf16.mxu0 %v2550
    %3640 = vmatpush2.bf16.msra.mxu0 %v2549
    %3641 = vmatprep.subr.bf16.mxu0 %v2542
    %3642 = vmatpush2.bf16.msra.mxu0 %v2541
    %3643 = vmatprep.subr.bf16.mxu0 %v2534
    %3644 = vmatpush2.bf16.msra.mxu0 %v2533
    %3645 = vmatprep.subr.bf16.mxu0 %v2526
    %3646 = vmatpush2.bf16.msra.mxu0 %v2525
    %3647 = vmatprep.subr.bf16.mxu0 %v2518
    %3648 = vmatpush2.bf16.msra.mxu0 %v2517
    %3649 = vmatprep.subr.bf16.mxu0 %v2510
    %3650 = vmatpush2.bf16.msra.mxu0 %v2509
    %3651 = vmatprep.mubr.bf16.mxu0 %v92
    %3652 = vmatmul.mubr.bf16.gmra.mxu0 %v91
    %v3653 = vpop.f32.mrf.mxu0
    %v3654 = vadd.f32 %v3613, %v3653
    %v3655 = vpop.f32.mrf.mxu0
    %v3656 = vadd.f32 %v3615, %v3655
    %v3657 = vpop.f32.mrf.mxu0
    %v3658 = vpop.f32.mrf.mxu0
    %3659 = vdwg.mxu0
    %3660 = vmatprep.subr.bf16.mxu0 %v2630
    %3661 = vmatpush1.bf16.msra.mxu0 %v2629
    %3662 = vmatprep.subr.bf16.mxu0 %v2622
    %3663 = vmatpush1.bf16.msra.mxu0 %v2621
    %3664 = vmatprep.subr.bf16.mxu0 %v2614
    %3665 = vmatpush1.bf16.msra.mxu0 %v2613
    %3666 = vmatprep.subr.bf16.mxu0 %v2606
    %3667 = vmatpush1.bf16.msra.mxu0 %v2605
    %3668 = vmatprep.subr.bf16.mxu0 %v2598
    %3669 = vmatpush1.bf16.msra.mxu0 %v2597
    %3670 = vmatprep.subr.bf16.mxu0 %v2590
    %3671 = vmatpush1.bf16.msra.mxu0 %v2589
    %3672 = vmatprep.subr.bf16.mxu0 %v2582
    %3673 = vmatpush1.bf16.msra.mxu0 %v2581
    %3674 = vmatprep.subr.bf16.mxu0 %v2574
    %3675 = vmatpush1.bf16.msra.mxu0 %v2573
    %3676 = vmatprep.subr.bf16.mxu0 %v2694
    %3677 = vmatpush2.bf16.msra.mxu0 %v2693
    %3678 = vmatprep.subr.bf16.mxu0 %v2686
    %3679 = vmatpush2.bf16.msra.mxu0 %v2685
    %3680 = vmatprep.subr.bf16.mxu0 %v2678
    %3681 = vmatpush2.bf16.msra.mxu0 %v2677
    %3682 = vmatprep.subr.bf16.mxu0 %v2670
    %3683 = vmatpush2.bf16.msra.mxu0 %v2669
    %3684 = vmatprep.subr.bf16.mxu0 %v2662
    %3685 = vmatpush2.bf16.msra.mxu0 %v2661
    %3686 = vmatprep.subr.bf16.mxu0 %v2654
    %3687 = vmatpush2.bf16.msra.mxu0 %v2653
    %3688 = vmatprep.subr.bf16.mxu0 %v2646
    %3689 = vmatpush2.bf16.msra.mxu0 %v2645
    %3690 = vmatprep.subr.bf16.mxu0 %v2638
    %3691 = vmatpush2.bf16.msra.mxu0 %v2637
    %3692 = vmatprep.mubr.bf16.mxu0 %v94
    %3693 = vmatmul.mubr.bf16.gmra.mxu0 %v93
    %v3694 = vpop.f32.mrf.mxu0
    %v3695 = vadd.f32 %v3654, %v3694
    %v3696 = vpop.f32.mrf.mxu0
    %v3697 = vadd.f32 %v3656, %v3696
    %v3698 = vpop.f32.mrf.mxu0
    %v3699 = vpop.f32.mrf.mxu0
    %3700 = vdwg.mxu0
    %3701 = vmatprep.subr.bf16.mxu0 %v2248
    %3702 = vmatpush1.bf16.msra.mxu0 %v2247
    %3703 = vmatprep.subr.bf16.mxu0 %v2240
    %3704 = vmatpush1.bf16.msra.mxu0 %v2239
    %3705 = vmatprep.subr.bf16.mxu0 %v2232
    %3706 = vmatpush1.bf16.msra.mxu0 %v2231
    %3707 = vmatprep.subr.bf16.mxu0 %v2224
    %3708 = vmatpush1.bf16.msra.mxu0 %v2223
    %3709 = vmatprep.subr.bf16.mxu0 %v2216
    %3710 = vmatpush1.bf16.msra.mxu0 %v2215
    %3711 = vmatprep.subr.bf16.mxu0 %v2208
    %3712 = vmatpush1.bf16.msra.mxu0 %v2207
    %3713 = vmatprep.subr.bf16.mxu0 %v2200
    %3714 = vmatpush1.bf16.msra.mxu0 %v2199
    %3715 = vmatprep.subr.bf16.mxu0 %v2192
    %3716 = vmatpush1.bf16.msra.mxu0 %v2191
    %3717 = vmatprep.subr.bf16.mxu0 %v2312
    %3718 = vmatpush2.bf16.msra.mxu0 %v2311
    %3719 = vmatprep.subr.bf16.mxu0 %v2304
    %3720 = vmatpush2.bf16.msra.mxu0 %v2303
    %3721 = vmatprep.subr.bf16.mxu0 %v2296
    %3722 = vmatpush2.bf16.msra.mxu0 %v2295
    %3723 = vmatprep.subr.bf16.mxu0 %v2288
    %3724 = vmatpush2.bf16.msra.mxu0 %v2287
    %3725 = vmatprep.subr.bf16.mxu0 %v2280
    %3726 = vmatpush2.bf16.msra.mxu0 %v2279
    %3727 = vmatprep.subr.bf16.mxu0 %v2272
    %3728 = vmatpush2.bf16.msra.mxu0 %v2271
    %3729 = vmatprep.subr.bf16.mxu0 %v2264
    %3730 = vmatpush2.bf16.msra.mxu0 %v2263
    %3731 = vmatprep.subr.bf16.mxu0 %v2256
    %3732 = vmatpush2.bf16.msra.mxu0 %v2255
    %3733 = vmatprep.mubr.bf16.mxu0 %v88
    %3734 = vmatmul.mubr.bf16.gmra.mxu0 %v87
    %v3735 = vpop.f32.mrf.mxu0
    %v3736 = vadd.f32 %v636, %v3735
    %v3737 = vpop.f32.mrf.mxu0
    %v3738 = vadd.f32 %v640, %v3737
    %v3739 = vpop.f32.mrf.mxu0
    %v3740 = vpop.f32.mrf.mxu0
    %3741 = vdwg.mxu0
    %3742 = vmatprep.subr.bf16.mxu0 %v2376
    %3743 = vmatpush1.bf16.msra.mxu0 %v2375
    %3744 = vmatprep.subr.bf16.mxu0 %v2368
    %3745 = vmatpush1.bf16.msra.mxu0 %v2367
    %3746 = vmatprep.subr.bf16.mxu0 %v2360
    %3747 = vmatpush1.bf16.msra.mxu0 %v2359
    %3748 = vmatprep.subr.bf16.mxu0 %v2352
    %3749 = vmatpush1.bf16.msra.mxu0 %v2351
    %3750 = vmatprep.subr.bf16.mxu0 %v2344
    %3751 = vmatpush1.bf16.msra.mxu0 %v2343
    %3752 = vmatprep.subr.bf16.mxu0 %v2336
    %3753 = vmatpush1.bf16.msra.mxu0 %v2335
    %3754 = vmatprep.subr.bf16.mxu0 %v2328
    %3755 = vmatpush1.bf16.msra.mxu0 %v2327
    %3756 = vmatprep.subr.bf16.mxu0 %v2320
    %3757 = vmatpush1.bf16.msra.mxu0 %v2319
    %3758 = vmatprep.subr.bf16.mxu0 %v2440
    %3759 = vmatpush2.bf16.msra.mxu0 %v2439
    %3760 = vmatprep.subr.bf16.mxu0 %v2432
    %3761 = vmatpush2.bf16.msra.mxu0 %v2431
    %3762 = vmatprep.subr.bf16.mxu0 %v2424
    %3763 = vmatpush2.bf16.msra.mxu0 %v2423
    %3764 = vmatprep.subr.bf16.mxu0 %v2416
    %3765 = vmatpush2.bf16.msra.mxu0 %v2415
    %3766 = vmatprep.subr.bf16.mxu0 %v2408
    %3767 = vmatpush2.bf16.msra.mxu0 %v2407
    %3768 = vmatprep.subr.bf16.mxu0 %v2400
    %3769 = vmatpush2.bf16.msra.mxu0 %v2399
    %3770 = vmatprep.subr.bf16.mxu0 %v2392
    %3771 = vmatpush2.bf16.msra.mxu0 %v2391
    %3772 = vmatprep.subr.bf16.mxu0 %v2384
    %3773 = vmatpush2.bf16.msra.mxu0 %v2383
    %3774 = vmatprep.mubr.bf16.mxu0 %v90
    %3775 = vmatmul.mubr.bf16.gmra.mxu0 %v89
    %v3776 = vpop.f32.mrf.mxu0
    %v3777 = vadd.f32 %v3736, %v3776
    %v3778 = vpop.f32.mrf.mxu0
    %v3779 = vadd.f32 %v3738, %v3778
    %v3780 = vpop.f32.mrf.mxu0
    %v3781 = vpop.f32.mrf.mxu0
    %3782 = vdwg.mxu0
    %3783 = vmatprep.subr.bf16.mxu0 %v2504
    %3784 = vmatpush1.bf16.msra.mxu0 %v2503
    %3785 = vmatprep.subr.bf16.mxu0 %v2496
    %3786 = vmatpush1.bf16.msra.mxu0 %v2495
    %3787 = vmatprep.subr.bf16.mxu0 %v2488
    %3788 = vmatpush1.bf16.msra.mxu0 %v2487
    %3789 = vmatprep.subr.bf16.mxu0 %v2480
    %3790 = vmatpush1.bf16.msra.mxu0 %v2479
    %3791 = vmatprep.subr.bf16.mxu0 %v2472
    %3792 = vmatpush1.bf16.msra.mxu0 %v2471
    %3793 = vmatprep.subr.bf16.mxu0 %v2464
    %3794 = vmatpush1.bf16.msra.mxu0 %v2463
    %3795 = vmatprep.subr.bf16.mxu0 %v2456
    %3796 = vmatpush1.bf16.msra.mxu0 %v2455
    %3797 = vmatprep.subr.bf16.mxu0 %v2448
    %3798 = vmatpush1.bf16.msra.mxu0 %v2447
    %3799 = vmatprep.subr.bf16.mxu0 %v2568
    %3800 = vmatpush2.bf16.msra.mxu0 %v2567
    %3801 = vmatprep.subr.bf16.mxu0 %v2560
    %3802 = vmatpush2.bf16.msra.mxu0 %v2559
    %3803 = vmatprep.subr.bf16.mxu0 %v2552
    %3804 = vmatpush2.bf16.msra.mxu0 %v2551
    %3805 = vmatprep.subr.bf16.mxu0 %v2544
    %3806 = vmatpush2.bf16.msra.mxu0 %v2543
    %3807 = vmatprep.subr.bf16.mxu0 %v2536
    %3808 = vmatpush2.bf16.msra.mxu0 %v2535
    %3809 = vmatprep.subr.bf16.mxu0 %v2528
    %3810 = vmatpush2.bf16.msra.mxu0 %v2527
    %3811 = vmatprep.subr.bf16.mxu0 %v2520
    %3812 = vmatpush2.bf16.msra.mxu0 %v2519
    %3813 = vmatprep.subr.bf16.mxu0 %v2512
    %3814 = vmatpush2.bf16.msra.mxu0 %v2511
    %3815 = vmatprep.mubr.bf16.mxu0 %v92
    %3816 = vmatmul.mubr.bf16.gmra.mxu0 %v91
    %v3817 = vpop.f32.mrf.mxu0
    %v3818 = vadd.f32 %v3777, %v3817
    %v3819 = vpop.f32.mrf.mxu0
    %v3820 = vadd.f32 %v3779, %v3819
    %v3821 = vpop.f32.mrf.mxu0
    %v3822 = vpop.f32.mrf.mxu0
    %3823 = vdwg.mxu0
    %3824 = vmatprep.subr.bf16.mxu0 %v2632
    %3825 = vmatpush1.bf16.msra.mxu0 %v2631
    %3826 = vmatprep.subr.bf16.mxu0 %v2624
    %3827 = vmatpush1.bf16.msra.mxu0 %v2623
    %3828 = vmatprep.subr.bf16.mxu0 %v2616
    %3829 = vmatpush1.bf16.msra.mxu0 %v2615
    %3830 = vmatprep.subr.bf16.mxu0 %v2608
    %3831 = vmatpush1.bf16.msra.mxu0 %v2607
    %3832 = vmatprep.subr.bf16.mxu0 %v2600
    %3833 = vmatpush1.bf16.msra.mxu0 %v2599
    %3834 = vmatprep.subr.bf16.mxu0 %v2592
    %3835 = vmatpush1.bf16.msra.mxu0 %v2591
    %3836 = vmatprep.subr.bf16.mxu0 %v2584
    %3837 = vmatpush1.bf16.msra.mxu0 %v2583
    %3838 = vmatprep.subr.bf16.mxu0 %v2576
    %3839 = vmatpush1.bf16.msra.mxu0 %v2575
    %3840 = vmatprep.subr.bf16.mxu0 %v2696
    %3841 = vmatpush2.bf16.msra.mxu0 %v2695
    %3842 = vmatprep.subr.bf16.mxu0 %v2688
    %3843 = vmatpush2.bf16.msra.mxu0 %v2687
    %3844 = vmatprep.subr.bf16.mxu0 %v2680
    %3845 = vmatpush2.bf16.msra.mxu0 %v2679
    %3846 = vmatprep.subr.bf16.mxu0 %v2672
    %3847 = vmatpush2.bf16.msra.mxu0 %v2671
    %3848 = vmatprep.subr.bf16.mxu0 %v2664
    %3849 = vmatpush2.bf16.msra.mxu0 %v2663
    %3850 = vmatprep.subr.bf16.mxu0 %v2656
    %3851 = vmatpush2.bf16.msra.mxu0 %v2655
    %3852 = vmatprep.subr.bf16.mxu0 %v2648
    %3853 = vmatpush2.bf16.msra.mxu0 %v2647
    %3854 = vmatprep.subr.bf16.mxu0 %v2640
    %3855 = vmatpush2.bf16.msra.mxu0 %v2639
    %3856 = vmatprep.mubr.bf16.mxu0 %v94
    %3857 = vmatmul.mubr.bf16.gmra.mxu0 %v93
    %v3858 = vpop.f32.mrf.mxu0
    %v3859 = vadd.f32 %v3818, %v3858
    %v3860 = vpop.f32.mrf.mxu0
    %v3861 = vadd.f32 %v3820, %v3860
    %v3862 = vpop.f32.mrf.mxu0
    %v3863 = vpop.f32.mrf.mxu0
    %3864 = vdwg.mxu0
    %v3865 = vmax.f32 %v3367, 0.0
    %v3866 = vmax.f32 %v3369, 0.0
    %v3867 = vmax.f32 %v3531, 0.0
    %v3868 = vmax.f32 %v3533, 0.0
    %v3869 = vmax.f32 %v3695, 0.0
    %v3870 = vmax.f32 %v3697, 0.0
    %v3871 = vmax.f32 %v3859, 0.0
    %v3872 = vmax.f32 %v3861, 0.0
    %v3881 = vcombine.low %v3865, %v3866
    %v3882 = vcombine.low %v3867, %v3868
    %v3884 = vunpack.c.l.s4 1983009808
    %v3885 = vunpack.c.0.s8 %v3884
    %v3886 = vlaneseq
    %v3887 = vshrl.u32 %v3886, 7
    %v3888 = vsub.s32 %v3885, %v3887
    %v3889 = vrot.slane %v3881, %v3888
    %v3891 = vunpack.c.l.s4 1983009808
    %v3892 = vunpack.c.0.s8 %v3891
    %v3893 = vlaneseq
    %v3894 = vshrl.u32 %v3893, 7
    %v3895 = vsub.s32 %v3892, %v3894
    %v3896 = vrot.slane %v3882, %v3895
    %v3897 = vcombine.low %v3889, %v3896
    %v3898 = vcombine.low %v3869, %v3870
    %v3899 = vcombine.low %v3871, %v3872
    %v3901 = vunpack.c.l.s4 1983009808
    %v3902 = vunpack.c.0.s8 %v3901
    %v3903 = vlaneseq
    %v3904 = vshrl.u32 %v3903, 7
    %v3905 = vsub.s32 %v3902, %v3904
    %v3906 = vrot.slane %v3898, %v3905
    %v3908 = vunpack.c.l.s4 1983009808
    %v3909 = vunpack.c.0.s8 %v3908
    %v3910 = vlaneseq
    %v3911 = vshrl.u32 %v3910, 7
    %v3912 = vsub.s32 %v3909, %v3911
    %v3913 = vrot.slane %v3899, %v3912
    %v3914 = vcombine.low %v3906, %v3913
    %3917 = vst [vmem:[#allocation7] sm:$0xff] %v3897
    %3918 = vst [vmem:[#allocation7 + $0x8] sm:$0xff] %v3914
    // Predicated region
    $region22: #{axon_forward.1} parent=1 // pred_check
      _
    $region23: #{axon_forward.1} parent=1 // pred_check_branch
      %3920 = sbr.rel (0) target = $region25
    $region24: #{axon_forward.1} parent=1 // pred_region
      %s3922 = ssub.s32 256, 256
      %3923 = vsyncadd [#allocation4], %s3922
      %s3925 = sshll.u32 [#allocation7], 4
      %s3926 = int_to_ptr.vmem [resolvable:$true] %s3925
      %3928 = dma.vmem_to_hbm [thread:$0]  %s3926, 256, %s3, [#allocation4]
    $region25: #{axon_forward.1} parent=1 // pred_fallthru
      _
    // Predicated region
    $region26: #{axon_forward.1} parent=1 // pred_check
      _
    $region27: #{axon_forward.1} parent=1 // pred_check_branch
      %3930 = sbr.rel (0) target = $region29
    $region28: #{axon_forward.1} parent=1 // pred_region
      %3931 = dma.done [#allocation4], 256
    $region29: #{axon_forward.1} parent=1 // pred_fallthru
      _
    %3932 = vsyncpa [#allocation3], 1
    %3933 = vsyncpa [#allocation6], 1
    %3934 = vsyncpa [#allocation4], 1

</llo_original>
